<compile_context>
chip_gen: v7x
topology: tpu7x:2x2x1
jax: 0.10.0
libtpu: 0.0.40
codegen_flags: <defaults>
</compile_context>

<pallas_src>
import functools

import jax
import jax.numpy as jnp
from jax.experimental import pallas as pl
from jax.experimental.pallas import tpu as pltpu

LN_EPS = 1e-5
_LANE = 128
_SUBLANE = 8


def _round_up(x, m):
    return ((x + m - 1) // m) * m


def _vmem_capacity_bytes():
    """Physical VMEM per TensorCore; conservative v7x value if undetectable."""
    try:
        info = pltpu.get_tpu_info()
        cap = int(getattr(info, "vmem_capacity_bytes", 0) or 0)
        if cap > 0:
            return cap
    except Exception:
        pass
    return 64 * 1024 * 1024


# ---------------------------------------------------------------------------
# Kernel
# ---------------------------------------------------------------------------
def actor_kernel(obs_ref, w1_ref, trunk_vec_ref, w2_ref, w3_ref, pol_vec_ref,
                 w4_ref, b4_ref, mu_ref, acc_ref,
                 *, ln_dim, ln_pad, matmul_dtype):
    """One (batch-tile, K-tile) grid step of the Actor forward pass."""
    k = pl.program_id(1)

    # Trunk first matmul, accumulated in f32 across the (optional) K axis.
    partial = jnp.dot(obs_ref[...].astype(matmul_dtype), w1_ref[...],
                      preferred_element_type=jnp.float32)

    @pl.when(k == 0)
    def _():
        acc_ref[...] = partial

    @pl.when(k > 0)
    def _():
        acc_ref[...] += partial

    @pl.when(k == pl.num_programs(1) - 1)
    def _():
        def dot(a, w_ref):
            return jnp.dot(a.astype(matmul_dtype), w_ref[...],
                           preferred_element_type=jnp.float32)

        b1 = trunk_vec_ref[0:1, :]
        gamma = trunk_vec_ref[1:2, :]
        beta = trunk_vec_ref[2:3, :]

        # Linear -> LayerNorm -> Tanh.  Padded feature columns of `h` are
        # exactly zero (w1/b1/gamma/beta zero-padded in prepare_actor_params),
        # so the statistics are corrected to cover only the real ln_dim cols.
        h = acc_ref[...] + b1
        inv_n = 1.0 / float(ln_dim)
        mean = jnp.sum(h, axis=-1, keepdims=True) * inv_n
        centered = h - mean
        sq_sum = jnp.sum(centered * centered, axis=-1, keepdims=True)
        if ln_pad:  # remove the (0 - mean)^2 contribution of padded columns
            sq_sum = sq_sum - float(ln_pad) * (mean * mean)
        h = centered * jax.lax.rsqrt(sq_sum * inv_n + LN_EPS)
        h = jnp.tanh(h * gamma + beta)

        # Policy: Linear -> ReLU -> Linear -> ReLU -> Linear -> Tanh.
        h = jnp.maximum(dot(h, w2_ref) + pol_vec_ref[0:1, :], 0.0)
        h = jnp.maximum(dot(h, w3_ref) + pol_vec_ref[1:2, :], 0.0)
        mu = jnp.tanh(dot(h, w4_ref) + b4_ref[...])
        mu_ref[...] = mu.astype(mu_ref.dtype)


# ---------------------------------------------------------------------------
# One-time parameter preparation (hoisted out of the forward path)
# ---------------------------------------------------------------------------
def prepare_actor_params(params, *, matmul_dtype=jnp.bfloat16,
                         vmem_budget_bytes=None):
    """Pad widths to lane multiples, cast MXU operands, pack bias vectors,
    and plan VMEM residency / K-tiling once.  The returned dict is what
    `actor_forward` consumes; padding relies on THIS function providing the
    zero padding (do not pass pre-padded params)."""
    f32 = jnp.float32
    mm = jnp.dtype(matmul_dtype)
    mm_sz = mm.itemsize

    w1_raw = jnp.asarray(params["w1"], f32)
    repr_dim, feature_dim = w1_raw.shape
    hidden_dim = jnp.asarray(params["w2"]).shape[1]
    action_dim = jnp.asarray(params["w4"]).shape[1]

    feat_p = _round_up(feature_dim, _LANE)
    hid_p = _round_up(hidden_dim, _LANE)
    act_p = _round_up(action_dim, _LANE)

    cap = _vmem_capacity_bytes()
    if vmem_budget_bytes:
        budget = int(vmem_budget_bytes)
    else:
        budget = max(cap - (16 << 20), 32 << 20)   # 112 MiB on v5e/v6e, 48 MiB v7x

    # Always-resident, single-buffered params (everything but w1).
    other_bytes = (_SUBLANE * feat_p * 4          # b1 / gamma / beta slab (f32)
                   + feat_p * hid_p * mm_sz       # w2
                   + hid_p * hid_p * mm_sz        # w3
                   + _SUBLANE * hid_p * 4         # b2 / b3 slab (f32)
                   + hid_p * act_p * mm_sz        # w4
                   + act_p * 4)                   # b4 (f32)

    def tile_act_bytes(tb, tk):
        # obs tile (f32, x2 buffers) + mu tile (f32, x2) + f32 trunk
        # accumulator scratch + headroom for in-kernel temps / compiler slack.
        return (2 * tb * tk * 4
                + 2 * tb * act_p * 4
                + tb * feat_p * 4
                + 3 * tb * max(feat_p, hid_p) * 4)

    # K-tiling decision: keep w1 fully resident (single-buffered, constant
    # index_map) whenever a >=128-row batch tile still fits; otherwise stream
    # w1 along repr_dim in (tk, feat_p) blocks (double-buffered).
    probe_tb = 128
    w1_full_bytes = repr_dim * feat_p * mm_sz
    if other_bytes + w1_full_bytes + tile_act_bytes(probe_tb, repr_dim) <= budget:
        tk = repr_dim
        repr_p = repr_dim
        w1_resident = w1_full_bytes
    else:
        tk = 256
        for cand in (2048, 1024, 512, 256):
            if (other_bytes + 2 * cand * feat_p * mm_sz
                    + tile_act_bytes(probe_tb, cand)) <= budget:
                tk = cand
                break
        repr_p = _round_up(repr_dim, tk)
        w1_resident = 2 * tk * feat_p * mm_sz
    num_k = repr_p // tk

    def pad_mat(a, rows, cols, dtype):
        a = jnp.asarray(a, f32)
        a = jnp.pad(a, ((0, rows - a.shape[0]), (0, cols - a.shape[1])))
        return a.astype(dtype)

    def vec(a, width):
        a = jnp.asarray(a, f32).reshape(-1)
        return jnp.zeros((width,), f32).at[: a.shape[0]].set(a)

    trunk_vecs = jnp.stack(
        [vec(params["b1"], feat_p),
         vec(params["ln_g"], feat_p),
         vec(params["ln_b"], feat_p)]
        + [jnp.zeros((feat_p,), f32)] * (_SUBLANE - 3))
    pol_vecs = jnp.stack(
        [vec(params["b2"], hid_p),
         vec(params["b3"], hid_p)]
        + [jnp.zeros((hid_p,), f32)] * (_SUBLANE - 2))

    weights = (
        pad_mat(params["w1"], repr_p, feat_p, mm),
        trunk_vecs,
        pad_mat(params["w2"], feat_p, hid_p, mm),
        pad_mat(params["w3"], hid_p, hid_p, mm),
        pol_vecs,
        pad_mat(params["w4"], hid_p, act_p, mm),
        pad_mat(jnp.asarray(params["b4"], f32).reshape(1, -1), 1, act_p, f32),
    )

    return dict(
        weights=weights, matmul_dtype=mm,
        repr_dim=repr_dim, repr_p=repr_p, tk=tk, num_k=num_k,
        feature_dim=feature_dim, feat_p=feat_p,
        hid_p=hid_p, action_dim=action_dim, act_p=act_p,
        resident_bytes=other_bytes + w1_resident,
        budget_bytes=budget, vmem_cap_bytes=cap,
    )


# ---------------------------------------------------------------------------
# Forward
# ---------------------------------------------------------------------------
def actor_forward(obs, std_scalar, prepared, *, batch_tile=None):
    """Actor.forward: returns (mu, std), the TruncatedNormal parameters.

    # TODO(synk): utils.TruncatedNormal is a distribution object (sample /
    # log_prob helpers) with no Pallas equivalent; we return its parameters.
    """
    p = prepared
    obs = jnp.asarray(obs, jnp.float32)      # f32 HBM feed; bf16 cast is in-kernel
    B, rd = obs.shape
    assert rd == p["repr_dim"], "obs feature dim mismatch"

    feat_p, hid_p, act_p = p["feat_p"], p["hid_p"], p["act_p"]
    tk, num_k, repr_p = p["tk"], p["num_k"], p["repr_p"]

    def tile_act_bytes(tb):
        return (2 * tb * tk * 4 + 2 * tb * act_p * 4 + tb * feat_p * 4
                + 3 * tb * max(feat_p, hid_p) * 4)

    b8 = _round_up(B, _SUBLANE)
    if batch_tile is not None:
        tb = int(batch_tile)
    else:
        headroom = p["budget_bytes"] - p["resident_bytes"]
        candidates = ([b8] if b8 <= 1024 else []) + \
                     [c for c in (1024, 512, 256, 128, 64, 32, 16, 8) if c < b8]
        fitting = [c for c in candidates if tile_act_bytes(c) <= headroom]
        if fitting:
            best = fitting[0]
            div = next((c for c in fitting if b8 % c == 0), None)
            # Prefer a tile that divides the batch (no host-side obs pad) unless
            # that would cost more than 2x in tile size.
            tb = div if (div is not None and 2 * div >= best) else best
        else:
            tb = min(b8, 8)

    b_pad = _round_up(B, tb)
    col_pad = repr_p - rd
    if b_pad != B or col_pad:
        obs = jnp.pad(obs, ((0, b_pad - B), (0, col_pad)))
    num_b = b_pad // tb

    vmem_limit = int(min(
        max(2 * p["resident_bytes"] + tile_act_bytes(tb) + (4 << 20), 32 << 20),
        p["vmem_cap_bytes"] - (8 << 20)))

    kernel = functools.partial(
        actor_kernel,
        ln_dim=p["feature_dim"],
        ln_pad=feat_p - p["feature_dim"],
        matmul_dtype=p["matmul_dtype"],
    )

    w1, trunk_vecs, w2, w3, pol_vecs, w4, b4 = p["weights"]

    def run(single_buffer_weights):
        pm = {"pipeline_mode": pl.Buffered(1)} if single_buffer_weights else {}
        const = lambda i, k: (0, 0)
        w1_kwargs = pm if num_k == 1 else {}   # double-buffer w1 when streamed
        in_specs = [
            # obs tile: default double-buffering (prefetch tile i+1 / k+1).
            # TODO(synk): on v7x, sweep pl.Buffered(3) here if DMA is exposed.
            pl.BlockSpec((tb, tk), lambda i, k: (i, k)),
            pl.BlockSpec((tk, feat_p), lambda i, k: (k, 0), **w1_kwargs),
            pl.BlockSpec(trunk_vecs.shape, const, **pm),
            pl.BlockSpec(w2.shape, const, **pm),
            pl.BlockSpec(w3.shape, const, **pm),
            pl.BlockSpec(pol_vecs.shape, const, **pm),
            pl.BlockSpec(w4.shape, const, **pm),
            pl.BlockSpec(b4.shape, const, **pm),
        ]
        out_specs = pl.BlockSpec((tb, act_p), lambda i, k: (i, 0))
        call = pl.pallas_call(
            kernel,
            out_shape=jax.ShapeDtypeStruct((b_pad, act_p), jnp.float32),
            grid_spec=pltpu.PrefetchScalarGridSpec(
                num_scalar_prefetch=0,
                grid=(num_b, num_k),
                in_specs=in_specs,
                out_specs=out_specs,
                scratch_shapes=[pltpu.VMEM((tb, feat_p), jnp.float32)],
            ),
            compiler_params=pltpu.CompilerParams(
                # TODO(synk): on v7x, try pltpu.CORE_PARALLEL on the batch axis
                # to shard tiles across the two TensorCores.
                dimension_semantics=("parallel", "arbitrary"),
                vmem_limit_bytes=vmem_limit,
            ),
        )
        return call(obs, w1, trunk_vecs, w2, w3, pol_vecs, w4, b4)

    try:
        mu_pad = run(True)
    except Exception:
        # Fallback for JAX builds without single-buffer pipeline_mode support.
        mu_pad = run(False)

    mu = mu_pad[:B, :p["action_dim"]]
    # std is a constant broadcast of the scalar; producing it in-kernel would
    # only add a second output DMA, so it is computed host-side.
    std = jnp.full_like(mu, std_scalar)
    return mu, std


# ---------------------------------------------------------------------------
# Synthetic init + pure-JAX reference
# ---------------------------------------------------------------------------
def init_actor_params(key, repr_dim, feature_dim, hidden_dim, action_dim):
    """Deterministic synthetic init (stand-in for utils.weight_init)."""
    ks = jax.random.split(key, 4)

    def linear(k, fan_in, fan_out):
        w = jax.random.normal(k, (fan_in, fan_out), jnp.float32) / jnp.sqrt(fan_in)
        b = jnp.zeros((1, fan_out), jnp.float32)
        return w, b

    w1, b1 = linear(ks[0], repr_dim, feature_dim)
    w2, b2 = linear(ks[1], feature_dim, hidden_dim)
    w3, b3 = linear(ks[2], hidden_dim, hidden_dim)
    w4, b4 = linear(ks[3], hidden_dim, action_dim)
    return {
        "w1": w1, "b1": b1,
        "ln_g": jnp.ones((1, feature_dim), jnp.float32),
        "ln_b": jnp.zeros((1, feature_dim), jnp.float32),
        "w2": w2, "b2": b2,
        "w3": w3, "b3": b3,
        "w4": w4, "b4": b4,
    }


def actor_reference(obs, std_scalar, p):
    h = obs @ p["w1"] + p["b1"]
    mean = jnp.mean(h, axis=-1, keepdims=True)
    var = jnp.mean(jnp.square(h - mean), axis=-1, keepdims=True)
    h = (h - mean) / jnp.sqrt(var + LN_EPS) * p["ln_g"] + p["ln_b"]
    h = jnp.tanh(h)
    h = jnp.maximum(h @ p["w2"] + p["b2"], 0.0)
    h = jnp.maximum(h @ p["w3"] + p["b3"], 0.0)
    mu = jnp.tanh(h @ p["w4"] + p["b4"])
    return mu, jnp.ones_like(mu) * std_scalar


if __name__ == "__main__":
    batch, repr_dim, feature_dim, hidden_dim, action_dim = 2, 32, 64, 32, 4
    std_scalar = 0.2

    key = jax.random.PRNGKey(0)
    k_obs, k_par, k_obs2, k_par2, k_obs3 = jax.random.split(key, 5)
    obs = jax.random.normal(k_obs, (batch, repr_dim), jnp.float32)
    params = init_actor_params(k_par, repr_dim, feature_dim, hidden_dim, action_dim)
    mu_ref, std_ref = actor_reference(obs, std_scalar, params)

    # Exact f32-MXU path.
    prep_f32 = prepare_actor_params(params, matmul_dtype=jnp.float32)
    mu, std = actor_forward(obs, std_scalar, prep_f32)
    jax.block_until_ready((mu, std))
    assert mu.shape == (batch, action_dim)
    assert jnp.allclose(mu, mu_ref, atol=1e-5, rtol=1e-5), "mu mismatch (f32)"
    assert jnp.allclose(std, std_ref, atol=1e-6), "std mismatch"

    # Default bf16 MXU feed (looser tolerance vs the f32 reference).
    prep_bf16 = prepare_actor_params(params)
    mu_bf16, _ = actor_forward(obs, std_scalar, prep_bf16)
    jax.block_until_ready(mu_bf16)
    assert jnp.allclose(mu_bf16, mu_ref, atol=5e-2, rtol=5e-2), "mu mismatch (bf16)"

    # Multi-tile batch with a non-divisible batch (forces padded last tile).
    obs2 = jax.random.normal(k_obs2, (50, repr_dim), jnp.float32)
    mu2, _ = actor_forward(obs2, std_scalar, prep_f32, batch_tile=16)
    jax.block_until_ready(mu2)
    mu2_ref, _ = actor_reference(obs2, std_scalar, params)
    assert jnp.allclose(mu2, mu2_ref, atol=1e-5, rtol=1e-5), "mu mismatch (tiled)"

    # K-tiled (streamed w1) path, forced via a tiny VMEM budget.
    repr_dim2 = 300
    params2 = init_actor_params(k_par2, repr_dim2, feature_dim, hidden_dim, action_dim)
    prep_kt = prepare_actor_params(params2, matmul_dtype=jnp.float32,
                                   vmem_budget_bytes=256 * 1024)
    assert prep_kt["num_k"] > 1, "expected K-tiling to trigger"
    obs3 = jax.random.normal(k_obs3, (16, repr_dim2), jnp.float32)
    mu3, _ = actor_forward(obs3, std_scalar, prep_kt)
    jax.block_until_ready(mu3)
    mu3_ref, _ = actor_reference(obs3, std_scalar, params2)
    assert jnp.allclose(mu3, mu3_ref, atol=1e-4, rtol=1e-4), "mu mismatch (k-tiled)"

    print("KERNEL_OK")
</pallas_src>

<mosaic_0001>
module attributes {stable_mosaic.version = 11 : i64} {
  func.func @actor_kernel(%arg0: i32, %arg1: i32, %arg2: memref<8x32xf32, #tpu.memory_space<vmem>>, %arg3: memref<32x128xf32, #tpu.memory_space<vmem>>, %arg4: memref<8x128xf32, #tpu.memory_space<vmem>>, %arg5: memref<128x128xf32, #tpu.memory_space<vmem>>, %arg6: memref<128x128xf32, #tpu.memory_space<vmem>>, %arg7: memref<8x128xf32, #tpu.memory_space<vmem>>, %arg8: memref<128x128xf32, #tpu.memory_space<vmem>>, %arg9: memref<1x128xf32, #tpu.memory_space<vmem>>, %arg10: memref<8x128xf32, #tpu.memory_space<vmem>>, %arg11: memref<8x128xf32, #tpu.memory_space<vmem>>) attributes {dimension_semantics = [#tpu.dimension_semantics<parallel>, #tpu.dimension_semantics<arbitrary>], iteration_bounds = array<i64: 1, 1>, scalar_prefetch = 0 : i64, scratch_operands = 1 : i64, tpu.core_type = #tpu.core_type<tc>, window_params = [{transform_indices = @transform_0, window_bounds = array<i64: 8, 32>}, {pipeline_mode = #tpu.pipeline_mode<synchronous>, transform_indices = @transform_1, window_bounds = array<i64: 32, 128>}, {pipeline_mode = #tpu.pipeline_mode<synchronous>, transform_indices = @transform_2, window_bounds = array<i64: 8, 128>}, {pipeline_mode = #tpu.pipeline_mode<synchronous>, transform_indices = @transform_3, window_bounds = array<i64: 128, 128>}, {pipeline_mode = #tpu.pipeline_mode<synchronous>, transform_indices = @transform_4, window_bounds = array<i64: 128, 128>}, {pipeline_mode = #tpu.pipeline_mode<synchronous>, transform_indices = @transform_5, window_bounds = array<i64: 8, 128>}, {pipeline_mode = #tpu.pipeline_mode<synchronous>, transform_indices = @transform_6, window_bounds = array<i64: 128, 128>}, {pipeline_mode = #tpu.pipeline_mode<synchronous>, transform_indices = @transform_7, window_bounds = array<i64: 1, 128>}, {transform_indices = @transform_8, window_bounds = array<i64: 8, 128>}]} {
    %c0 = arith.constant 0 : index
    %c0_0 = arith.constant 0 : index
    %0 = vector.load %arg2[%c0, %c0_0] : memref<8x32xf32, #tpu.memory_space<vmem>>, vector<8x32xf32>
    %c0_1 = arith.constant 0 : index
    %c0_2 = arith.constant 0 : index
    %1 = vector.load %arg3[%c0_1, %c0_2] : memref<32x128xf32, #tpu.memory_space<vmem>>, vector<32x128xf32>
    %cst = arith.constant dense<0.000000e+00> : vector<8x128xf32>
    %2 = tpu.matmul %0, %1, %cst {dimension_numbers = #tpu.dot_dimension_numbers<[1], [0], [0], [1], [0, 0, 1, 1], [], []>} : vector<8x32xf32>, vector<32x128xf32>, vector<8x128xf32> -> vector<8x128xf32>
    %c0_i32 = arith.constant 0 : i32
    %3 = arith.cmpi eq, %arg1, %c0_i32 : i32
    %4 = arith.extui %3 : i1 to i32
    %c0_i32_3 = arith.constant 0 : i32
    %5 = arith.cmpi ne, %4, %c0_i32_3 : i32
    scf.if %5 {
      %c0_8 = arith.constant 0 : index
      %c0_9 = arith.constant 0 : index
      %12 = vector.load %arg11[%c0_8, %c0_9] : memref<8x128xf32, #tpu.memory_space<vmem>>, vector<8x128xf32>
      tpu.vector_store %arg11[%c0_8, %c0_9], %2 {strides = array<i32>} : memref<8x128xf32, #tpu.memory_space<vmem>>, vector<8x128xf32>,
    } else {
    }
    %c0_i32_4 = arith.constant 0 : i32
    %6 = arith.cmpi sgt, %arg1, %c0_i32_4 : i32
    %7 = arith.extui %6 : i1 to i32
    %c0_i32_5 = arith.constant 0 : i32
    %8 = arith.cmpi ne, %7, %c0_i32_5 : i32
    scf.if %8 {
      %c0_8 = arith.constant 0 : index
      %c0_9 = arith.constant 0 : index
      %12 = vector.load %arg11[%c0_8, %c0_9] : memref<8x128xf32, #tpu.memory_space<vmem>>, vector<8x128xf32>
      %13 = arith.addf %12, %2 : vector<8x128xf32>
      %c0_10 = arith.constant 0 : index
      %c0_11 = arith.constant 0 : index
      %14 = vector.load %arg11[%c0_10, %c0_11] : memref<8x128xf32, #tpu.memory_space<vmem>>, vector<8x128xf32>
      tpu.vector_store %arg11[%c0_10, %c0_11], %13 {strides = array<i32>} : memref<8x128xf32, #tpu.memory_space<vmem>>, vector<8x128xf32>,
    } else {
    }
    %c0_i32_6 = arith.constant 0 : i32
    %9 = arith.cmpi eq, %arg1, %c0_i32_6 : i32
    %10 = arith.extui %9 : i1 to i32
    %c0_i32_7 = arith.constant 0 : i32
    %11 = arith.cmpi ne, %10, %c0_i32_7 : i32
    scf.if %11 {
      %c0_8 = arith.constant 0 : index
      %c0_9 = arith.constant 0 : index
      %12 = vector.load %arg4[%c0_8, %c0_9] : memref<8x128xf32, #tpu.memory_space<vmem>>, vector<1x128xf32>
      %c1 = arith.constant 1 : index
      %c0_10 = arith.constant 0 : index
      %13 = vector.load %arg4[%c1, %c0_10] : memref<8x128xf32, #tpu.memory_space<vmem>>, vector<1x128xf32>
      %c2 = arith.constant 2 : index
      %c0_11 = arith.constant 0 : index
      %14 = vector.load %arg4[%c2, %c0_11] : memref<8x128xf32, #tpu.memory_space<vmem>>, vector<1x128xf32>
      %c0_12 = arith.constant 0 : index
      %c0_13 = arith.constant 0 : index
      %15 = vector.load %arg11[%c0_12, %c0_13] : memref<8x128xf32, #tpu.memory_space<vmem>>, vector<8x128xf32>
      %16 = vector.broadcast %12 : vector<1x128xf32> to vector<8x128xf32>
      %17 = arith.addf %15, %16 : vector<8x128xf32>
      %cst_14 = arith.constant dense<0.000000e+00> : vector<8xf32>
      %18 = vector.multi_reduction <add>, %17, %cst_14 [1] : vector<8x128xf32> to vector<8xf32>
      %19 = vector.shape_cast %18 : vector<8xf32> to vector<8x1xf32>
      %cst_15 = arith.constant 1.562500e-02 : f32
      %20 = vector.broadcast %cst_15 : f32 to vector<8x1xf32>
      %21 = arith.mulf %19, %20 : vector<8x1xf32>
      %22 = vector.broadcast %21 : vector<8x1xf32> to vector<8x128xf32>
      %23 = arith.subf %17, %22 : vector<8x128xf32>
      %24 = arith.mulf %23, %23 : vector<8x128xf32>
      %cst_16 = arith.constant dense<0.000000e+00> : vector<8xf32>
      %25 = vector.multi_reduction <add>, %24, %cst_16 [1] : vector<8x128xf32> to vector<8xf32>
      %26 = vector.shape_cast %25 : vector<8xf32> to vector<8x1xf32>
      %27 = arith.mulf %21, %21 : vector<8x1xf32>
      %cst_17 = arith.constant 6.400000e+01 : f32
      %28 = vector.broadcast %cst_17 : f32 to vector<8x1xf32>
      %29 = arith.mulf %28, %27 : vector<8x1xf32>
      %30 = arith.subf %26, %29 : vector<8x1xf32>
      %cst_18 = arith.constant 1.562500e-02 : f32
      %31 = vector.broadcast %cst_18 : f32 to vector<8x1xf32>
      %32 = arith.mulf %30, %31 : vector<8x1xf32>
      %cst_19 = arith.constant 9.99999974E-6 : f32
      %33 = vector.broadcast %cst_19 : f32 to vector<8x1xf32>
      %34 = arith.addf %32, %33 : vector<8x1xf32>
      %35 = math.rsqrt %34 : vector<8x1xf32>
      %36 = vector.broadcast %35 : vector<8x1xf32> to vector<8x128xf32>
      %37 = arith.mulf %23, %36 : vector<8x128xf32>
      %38 = vector.broadcast %13 : vector<1x128xf32> to vector<8x128xf32>
      %39 = arith.mulf %37, %38 : vector<8x128xf32>
      %40 = vector.broadcast %14 : vector<1x128xf32> to vector<8x128xf32>
      %41 = arith.addf %39, %40 : vector<8x128xf32>
      %42 = math.tanh %41 : vector<8x128xf32>
      %c0_20 = arith.constant 0 : index
      %c0_21 = arith.constant 0 : index
      %43 = vector.load %arg5[%c0_20, %c0_21] : memref<128x128xf32, #tpu.memory_space<vmem>>, vector<128x128xf32>
      %cst_22 = arith.constant dense<0.000000e+00> : vector<8x128xf32>
      %44 = tpu.matmul %42, %43, %cst_22 {dimension_numbers = #tpu.dot_dimension_numbers<[1], [0], [0], [1], [0, 0, 1, 1], [], []>} : vector<8x128xf32>, vector<128x128xf32>, vector<8x128xf32> -> vector<8x128xf32>
      %c0_23 = arith.constant 0 : index
      %c0_24 = arith.constant 0 : index
      %45 = vector.load %arg7[%c0_23, %c0_24] : memref<8x128xf32, #tpu.memory_space<vmem>>, vector<1x128xf32>
      %46 = vector.broadcast %45 : vector<1x128xf32> to vector<8x128xf32>
      %47 = arith.addf %44, %46 : vector<8x128xf32>
      %cst_25 = arith.constant 0.000000e+00 : f32
      %48 = vector.broadcast %cst_25 : f32 to vector<8x128xf32>
      %49 = arith.maximumf %47, %48 : vector<8x128xf32>
      %c0_26 = arith.constant 0 : index
      %c0_27 = arith.constant 0 : index
      %50 = vector.load %arg6[%c0_26, %c0_27] : memref<128x128xf32, #tpu.memory_space<vmem>>, vector<128x128xf32>
      %cst_28 = arith.constant dense<0.000000e+00> : vector<8x128xf32>
      %51 = tpu.matmul %49, %50, %cst_28 {dimension_numbers = #tpu.dot_dimension_numbers<[1], [0], [0], [1], [0, 0, 1, 1], [], []>} : vector<8x128xf32>, vector<128x128xf32>, vector<8x128xf32> -> vector<8x128xf32>
      %c1_29 = arith.constant 1 : index
      %c0_30 = arith.constant 0 : index
      %52 = vector.load %arg7[%c1_29, %c0_30] : memref<8x128xf32, #tpu.memory_space<vmem>>, vector<1x128xf32>
      %53 = vector.broadcast %52 : vector<1x128xf32> to vector<8x128xf32>
      %54 = arith.addf %51, %53 : vector<8x128xf32>
      %cst_31 = arith.constant 0.000000e+00 : f32
      %55 = vector.broadcast %cst_31 : f32 to vector<8x128xf32>
      %56 = arith.maximumf %54, %55 : vector<8x128xf32>
      %c0_32 = arith.constant 0 : index
      %c0_33 = arith.constant 0 : index
      %57 = vector.load %arg8[%c0_32, %c0_33] : memref<128x128xf32, #tpu.memory_space<vmem>>, vector<128x128xf32>
      %cst_34 = arith.constant dense<0.000000e+00> : vector<8x128xf32>
      %58 = tpu.matmul %56, %57, %cst_34 {dimension_numbers = #tpu.dot_dimension_numbers<[1], [0], [0], [1], [0, 0, 1, 1], [], []>} : vector<8x128xf32>, vector<128x128xf32>, vector<8x128xf32> -> vector<8x128xf32>
      %c0_35 = arith.constant 0 : index
      %c0_36 = arith.constant 0 : index
      %59 = vector.load %arg9[%c0_35, %c0_36] : memref<1x128xf32, #tpu.memory_space<vmem>>, vector<1x128xf32>
      %60 = vector.broadcast %59 : vector<1x128xf32> to vector<8x128xf32>
      %61 = arith.addf %58, %60 : vector<8x128xf32>
      %62 = math.tanh %61 : vector<8x128xf32>
      %c0_37 = arith.constant 0 : index
      %c0_38 = arith.constant 0 : index
      %63 = vector.load %arg10[%c0_37, %c0_38] : memref<8x128xf32, #tpu.memory_space<vmem>>, vector<8x128xf32>
      tpu.vector_store %arg10[%c0_37, %c0_38], %62 {strides = array<i32>} : memref<8x128xf32, #tpu.memory_space<vmem>>, vector<8x128xf32>,
    } else {
    }
    return
  }
  func.func @transform_0(%arg0: i32, %arg1: i32) -> (i32, i32) {
    %c0_i32 = arith.constant 0 : i32
    return %arg0, %arg1 : i32, i32
  }
  func.func @transform_1(%arg0: i32, %arg1: i32) -> (i32, i32) {
    %c0_i32 = arith.constant 0 : i32
    %c0_i32_0 = arith.constant 0 : i32
    return %arg1, %c0_i32 : i32, i32
  }
  func.func @transform_2(%arg0: i32, %arg1: i32) -> (i32, i32) {
    %c0_i32 = arith.constant 0 : i32
    %c0_i32_0 = arith.constant 0 : i32
    %c0_i32_1 = arith.constant 0 : i32
    return %c0_i32, %c0_i32_0 : i32, i32
  }
  func.func @transform_3(%arg0: i32, %arg1: i32) -> (i32, i32) {
    %c0_i32 = arith.constant 0 : i32
    %c0_i32_0 = arith.constant 0 : i32
    %c0_i32_1 = arith.constant 0 : i32
    return %c0_i32, %c0_i32_0 : i32, i32
  }
  func.func @transform_4(%arg0: i32, %arg1: i32) -> (i32, i32) {
    %c0_i32 = arith.constant 0 : i32
    %c0_i32_0 = arith.constant 0 : i32
    %c0_i32_1 = arith.constant 0 : i32
    return %c0_i32, %c0_i32_0 : i32, i32
  }
  func.func @transform_5(%arg0: i32, %arg1: i32) -> (i32, i32) {
    %c0_i32 = arith.constant 0 : i32
    %c0_i32_0 = arith.constant 0 : i32
    %c0_i32_1 = arith.constant 0 : i32
    return %c0_i32, %c0_i32_0 : i32, i32
  }
  func.func @transform_6(%arg0: i32, %arg1: i32) -> (i32, i32) {
    %c0_i32 = arith.constant 0 : i32
    %c0_i32_0 = arith.constant 0 : i32
    %c0_i32_1 = arith.constant 0 : i32
    return %c0_i32, %c0_i32_0 : i32, i32
  }
  func.func @transform_7(%arg0: i32, %arg1: i32) -> (i32, i32) {
    %c0_i32 = arith.constant 0 : i32
    %c0_i32_0 = arith.constant 0 : i32
    %c0_i32_1 = arith.constant 0 : i32
    return %c0_i32, %c0_i32_0 : i32, i32
  }
  func.func @transform_8(%arg0: i32, %arg1: i32) -> (i32, i32) {
    %c0_i32 = arith.constant 0 : i32
    %c0_i32_0 = arith.constant 0 : i32
    return %arg0, %c0_i32 : i32, i32
  }
}

module attributes {stable_mosaic.version = 11 : i64} {
  func.func @actor_kernel(%arg0: i32, %arg1: i32, %arg2: memref<8x32xf32, #tpu.memory_space<vmem>>, %arg3: memref<32x128xf32, #tpu.memory_space<vmem>>, %arg4: memref<8x128xf32, #tpu.memory_space<vmem>>, %arg5: memref<128x128xf32, #tpu.memory_space<vmem>>, %arg6: memref<128x128xf32, #tpu.memory_space<vmem>>, %arg7: memref<8x128xf32, #tpu.memory_space<vmem>>, %arg8: memref<128x128xf32, #tpu.memory_space<vmem>>, %arg9: memref<1x128xf32, #tpu.memory_space<vmem>>, %arg10: memref<8x128xf32, #tpu.memory_space<vmem>>, %arg11: memref<8x128xf32, #tpu.memory_space<vmem>>) attributes {dimension_semantics = [#tpu.dimension_semantics<parallel>, #tpu.dimension_semantics<arbitrary>], iteration_bounds = array<i64: 1, 1>, scalar_prefetch = 0 : i64, scratch_operands = 1 : i64, tpu.core_type = #tpu.core_type<tc>, window_params = [{transform_indices = @transform_0, window_bounds = array<i64: 8, 32>}, {transform_indices = @transform_1, window_bounds = array<i64: 32, 128>}, {pipeline_mode = #tpu.pipeline_mode<synchronous>, transform_indices = @transform_2, window_bounds = array<i64: 8, 128>}, {pipeline_mode = #tpu.pipeline_mode<synchronous>, transform_indices = @transform_3, window_bounds = array<i64: 128, 128>}, {pipeline_mode = #tpu.pipeline_mode<synchronous>, transform_indices = @transform_4, window_bounds = array<i64: 128, 128>}, {pipeline_mode = #tpu.pipeline_mode<synchronous>, transform_indices = @transform_5, window_bounds = array<i64: 8, 128>}, {pipeline_mode = #tpu.pipeline_mode<synchronous>, transform_indices = @transform_6, window_bounds = array<i64: 128, 128>}, {pipeline_mode = #tpu.pipeline_mode<synchronous>, transform_indices = @transform_7, window_bounds = array<i64: 1, 128>}, {transform_indices = @transform_8, window_bounds = array<i64: 8, 128>}]} {
    %c0 = arith.constant 0 : index
    %c0_0 = arith.constant 0 : index
    %0 = vector.load %arg2[%c0, %c0_0] : memref<8x32xf32, #tpu.memory_space<vmem>>, vector<8x32xf32>
    %c0_1 = arith.constant 0 : index
    %c0_2 = arith.constant 0 : index
    %1 = vector.load %arg3[%c0_1, %c0_2] : memref<32x128xf32, #tpu.memory_space<vmem>>, vector<32x128xf32>
    %cst = arith.constant dense<0.000000e+00> : vector<8x128xf32>
    %2 = tpu.matmul %0, %1, %cst {dimension_numbers = #tpu.dot_dimension_numbers<[1], [0], [0], [1], [0, 0, 1, 1], [], []>} : vector<8x32xf32>, vector<32x128xf32>, vector<8x128xf32> -> vector<8x128xf32>
    %c0_i32 = arith.constant 0 : i32
    %3 = arith.cmpi eq, %arg1, %c0_i32 : i32
    %4 = arith.extui %3 : i1 to i32
    %c0_i32_3 = arith.constant 0 : i32
    %5 = arith.cmpi ne, %4, %c0_i32_3 : i32
    scf.if %5 {
      %c0_8 = arith.constant 0 : index
      %c0_9 = arith.constant 0 : index
      %12 = vector.load %arg11[%c0_8, %c0_9] : memref<8x128xf32, #tpu.memory_space<vmem>>, vector<8x128xf32>
      tpu.vector_store %arg11[%c0_8, %c0_9], %2 {strides = array<i32>} : memref<8x128xf32, #tpu.memory_space<vmem>>, vector<8x128xf32>,
    } else {
    }
    %c0_i32_4 = arith.constant 0 : i32
    %6 = arith.cmpi sgt, %arg1, %c0_i32_4 : i32
    %7 = arith.extui %6 : i1 to i32
    %c0_i32_5 = arith.constant 0 : i32
    %8 = arith.cmpi ne, %7, %c0_i32_5 : i32
    scf.if %8 {
      %c0_8 = arith.constant 0 : index
      %c0_9 = arith.constant 0 : index
      %12 = vector.load %arg11[%c0_8, %c0_9] : memref<8x128xf32, #tpu.memory_space<vmem>>, vector<8x128xf32>
      %13 = arith.addf %12, %2 : vector<8x128xf32>
      %c0_10 = arith.constant 0 : index
      %c0_11 = arith.constant 0 : index
      %14 = vector.load %arg11[%c0_10, %c0_11] : memref<8x128xf32, #tpu.memory_space<vmem>>, vector<8x128xf32>
      tpu.vector_store %arg11[%c0_10, %c0_11], %13 {strides = array<i32>} : memref<8x128xf32, #tpu.memory_space<vmem>>, vector<8x128xf32>,
    } else {
    }
    %c0_i32_6 = arith.constant 0 : i32
    %9 = arith.cmpi eq, %arg1, %c0_i32_6 : i32
    %10 = arith.extui %9 : i1 to i32
    %c0_i32_7 = arith.constant 0 : i32
    %11 = arith.cmpi ne, %10, %c0_i32_7 : i32
    scf.if %11 {
      %c0_8 = arith.constant 0 : index
      %c0_9 = arith.constant 0 : index
      %12 = vector.load %arg4[%c0_8, %c0_9] : memref<8x128xf32, #tpu.memory_space<vmem>>, vector<1x128xf32>
      %c1 = arith.constant 1 : index
      %c0_10 = arith.constant 0 : index
      %13 = vector.load %arg4[%c1, %c0_10] : memref<8x128xf32, #tpu.memory_space<vmem>>, vector<1x128xf32>
      %c2 = arith.constant 2 : index
      %c0_11 = arith.constant 0 : index
      %14 = vector.load %arg4[%c2, %c0_11] : memref<8x128xf32, #tpu.memory_space<vmem>>, vector<1x128xf32>
      %c0_12 = arith.constant 0 : index
      %c0_13 = arith.constant 0 : index
      %15 = vector.load %arg11[%c0_12, %c0_13] : memref<8x128xf32, #tpu.memory_space<vmem>>, vector<8x128xf32>
      %16 = vector.broadcast %12 : vector<1x128xf32> to vector<8x128xf32>
      %17 = arith.addf %15, %16 : vector<8x128xf32>
      %cst_14 = arith.constant dense<0.000000e+00> : vector<8xf32>
      %18 = vector.multi_reduction <add>, %17, %cst_14 [1] : vector<8x128xf32> to vector<8xf32>
      %19 = vector.shape_cast %18 : vector<8xf32> to vector<8x1xf32>
      %cst_15 = arith.constant 1.562500e-02 : f32
      %20 = vector.broadcast %cst_15 : f32 to vector<8x1xf32>
      %21 = arith.mulf %19, %20 : vector<8x1xf32>
      %22 = vector.broadcast %21 : vector<8x1xf32> to vector<8x128xf32>
      %23 = arith.subf %17, %22 : vector<8x128xf32>
      %24 = arith.mulf %23, %23 : vector<8x128xf32>
      %cst_16 = arith.constant dense<0.000000e+00> : vector<8xf32>
      %25 = vector.multi_reduction <add>, %24, %cst_16 [1] : vector<8x128xf32> to vector<8xf32>
      %26 = vector.shape_cast %25 : vector<8xf32> to vector<8x1xf32>
      %27 = arith.mulf %21, %21 : vector<8x1xf32>
      %cst_17 = arith.constant 6.400000e+01 : f32
      %28 = vector.broadcast %cst_17 : f32 to vector<8x1xf32>
      %29 = arith.mulf %28, %27 : vector<8x1xf32>
      %30 = arith.subf %26, %29 : vector<8x1xf32>
      %cst_18 = arith.constant 1.562500e-02 : f32
      %31 = vector.broadcast %cst_18 : f32 to vector<8x1xf32>
      %32 = arith.mulf %30, %31 : vector<8x1xf32>
      %cst_19 = arith.constant 9.99999974E-6 : f32
      %33 = vector.broadcast %cst_19 : f32 to vector<8x1xf32>
      %34 = arith.addf %32, %33 : vector<8x1xf32>
      %35 = math.rsqrt %34 : vector<8x1xf32>
      %36 = vector.broadcast %35 : vector<8x1xf32> to vector<8x128xf32>
      %37 = arith.mulf %23, %36 : vector<8x128xf32>
      %38 = vector.broadcast %13 : vector<1x128xf32> to vector<8x128xf32>
      %39 = arith.mulf %37, %38 : vector<8x128xf32>
      %40 = vector.broadcast %14 : vector<1x128xf32> to vector<8x128xf32>
      %41 = arith.addf %39, %40 : vector<8x128xf32>
      %42 = math.tanh %41 : vector<8x128xf32>
      %c0_20 = arith.constant 0 : index
      %c0_21 = arith.constant 0 : index
      %43 = vector.load %arg5[%c0_20, %c0_21] : memref<128x128xf32, #tpu.memory_space<vmem>>, vector<128x128xf32>
      %cst_22 = arith.constant dense<0.000000e+00> : vector<8x128xf32>
      %44 = tpu.matmul %42, %43, %cst_22 {dimension_numbers = #tpu.dot_dimension_numbers<[1], [0], [0], [1], [0, 0, 1, 1], [], []>} : vector<8x128xf32>, vector<128x128xf32>, vector<8x128xf32> -> vector<8x128xf32>
      %c0_23 = arith.constant 0 : index
      %c0_24 = arith.constant 0 : index
      %45 = vector.load %arg7[%c0_23, %c0_24] : memref<8x128xf32, #tpu.memory_space<vmem>>, vector<1x128xf32>
      %46 = vector.broadcast %45 : vector<1x128xf32> to vector<8x128xf32>
      %47 = arith.addf %44, %46 : vector<8x128xf32>
      %cst_25 = arith.constant 0.000000e+00 : f32
      %48 = vector.broadcast %cst_25 : f32 to vector<8x128xf32>
      %49 = arith.maximumf %47, %48 : vector<8x128xf32>
      %c0_26 = arith.constant 0 : index
      %c0_27 = arith.constant 0 : index
      %50 = vector.load %arg6[%c0_26, %c0_27] : memref<128x128xf32, #tpu.memory_space<vmem>>, vector<128x128xf32>
      %cst_28 = arith.constant dense<0.000000e+00> : vector<8x128xf32>
      %51 = tpu.matmul %49, %50, %cst_28 {dimension_numbers = #tpu.dot_dimension_numbers<[1], [0], [0], [1], [0, 0, 1, 1], [], []>} : vector<8x128xf32>, vector<128x128xf32>, vector<8x128xf32> -> vector<8x128xf32>
      %c1_29 = arith.constant 1 : index
      %c0_30 = arith.constant 0 : index
      %52 = vector.load %arg7[%c1_29, %c0_30] : memref<8x128xf32, #tpu.memory_space<vmem>>, vector<1x128xf32>
      %53 = vector.broadcast %52 : vector<1x128xf32> to vector<8x128xf32>
      %54 = arith.addf %51, %53 : vector<8x128xf32>
      %cst_31 = arith.constant 0.000000e+00 : f32
      %55 = vector.broadcast %cst_31 : f32 to vector<8x128xf32>
      %56 = arith.maximumf %54, %55 : vector<8x128xf32>
      %c0_32 = arith.constant 0 : index
      %c0_33 = arith.constant 0 : index
      %57 = vector.load %arg8[%c0_32, %c0_33] : memref<128x128xf32, #tpu.memory_space<vmem>>, vector<128x128xf32>
      %cst_34 = arith.constant dense<0.000000e+00> : vector<8x128xf32>
      %58 = tpu.matmul %56, %57, %cst_34 {dimension_numbers = #tpu.dot_dimension_numbers<[1], [0], [0], [1], [0, 0, 1, 1], [], []>} : vector<8x128xf32>, vector<128x128xf32>, vector<8x128xf32> -> vector<8x128xf32>
      %c0_35 = arith.constant 0 : index
      %c0_36 = arith.constant 0 : index
      %59 = vector.load %arg9[%c0_35, %c0_36] : memref<1x128xf32, #tpu.memory_space<vmem>>, vector<1x128xf32>
      %60 = vector.broadcast %59 : vector<1x128xf32> to vector<8x128xf32>
      %61 = arith.addf %58, %60 : vector<8x128xf32>
      %62 = math.tanh %61 : vector<8x128xf32>
      %c0_37 = arith.constant 0 : index
      %c0_38 = arith.constant 0 : index
      %63 = vector.load %arg10[%c0_37, %c0_38] : memref<8x128xf32, #tpu.memory_space<vmem>>, vector<8x128xf32>
      tpu.vector_store %arg10[%c0_37, %c0_38], %62 {strides = array<i32>} : memref<8x128xf32, #tpu.memory_space<vmem>>, vector<8x128xf32>,
    } else {
    }
    return
  }
  func.func @transform_0(%arg0: i32, %arg1: i32) -> (i32, i32) {
    %c0_i32 = arith.constant 0 : i32
    return %arg0, %arg1 : i32, i32
  }
  func.func @transform_1(%arg0: i32, %arg1: i32) -> (i32, i32) {
    %c0_i32 = arith.constant 0 : i32
    %c0_i32_0 = arith.constant 0 : i32
    return %arg1, %c0_i32 : i32, i32
  }
  func.func @transform_2(%arg0: i32, %arg1: i32) -> (i32, i32) {
    %c0_i32 = arith.constant 0 : i32
    %c0_i32_0 = arith.constant 0 : i32
    %c0_i32_1 = arith.constant 0 : i32
    return %c0_i32, %c0_i32_0 : i32, i32
  }
  func.func @transform_3(%arg0: i32, %arg1: i32) -> (i32, i32) {
    %c0_i32 = arith.constant 0 : i32
    %c0_i32_0 = arith.constant 0 : i32
    %c0_i32_1 = arith.constant 0 : i32
    return %c0_i32, %c0_i32_0 : i32, i32
  }
  func.func @transform_4(%arg0: i32, %arg1: i32) -> (i32, i32) {
    %c0_i32 = arith.constant 0 : i32
    %c0_i32_0 = arith.constant 0 : i32
    %c0_i32_1 = arith.constant 0 : i32
    return %c0_i32, %c0_i32_0 : i32, i32
  }
  func.func @transform_5(%arg0: i32, %arg1: i32) -> (i32, i32) {
    %c0_i32 = arith.constant 0 : i32
    %c0_i32_0 = arith.constant 0 : i32
    %c0_i32_1 = arith.constant 0 : i32
    return %c0_i32, %c0_i32_0 : i32, i32
  }
  func.func @transform_6(%arg0: i32, %arg1: i32) -> (i32, i32) {
    %c0_i32 = arith.constant 0 : i32
    %c0_i32_0 = arith.constant 0 : i32
    %c0_i32_1 = arith.constant 0 : i32
    return %c0_i32, %c0_i32_0 : i32, i32
  }
  func.func @transform_7(%arg0: i32, %arg1: i32) -> (i32, i32) {
    %c0_i32 = arith.constant 0 : i32
    %c0_i32_0 = arith.constant 0 : i32
    %c0_i32_1 = arith.constant 0 : i32
    return %c0_i32, %c0_i32_0 : i32, i32
  }
  func.func @transform_8(%arg0: i32, %arg1: i32) -> (i32, i32) {
    %c0_i32 = arith.constant 0 : i32
    %c0_i32_0 = arith.constant 0 : i32
    return %arg0, %c0_i32 : i32, i32
  }
}

</mosaic_0001>

<llo_original>
// kernel: tpu_custom_call.1
$region0: #{tpu_custom_call.1}
  #allocation0 [shape = 'u32[]', space=smem, size = 0x4, offset = 0x4, fixed_abs, tag = 'smem constant byte address 0x4 - core index']
  #allocation1 [shape = 'u32[144,128]{1,0:T(1,128)}', space=vmem, size = 0x12000, scoped, tag = 'internal scratch']
  #allocation2 [shape = 'f32[8,128]{1,0:T(8,128)}', space=vmem, size = 0x1000, scoped, tag = 'scratch operand']
  %s0 = inlined_call_operand.hbm [shape: f32[8,32], index: 0, kind: input, shape index: {}]
  %s1 = inlined_call_operand.hbm [shape: f32[32,128], index: 1, kind: input, shape index: {}]
  %s2 = inlined_call_operand.hbm [shape: f32[8,128], index: 2, kind: input, shape index: {}]
  %s3 = inlined_call_operand.hbm [shape: f32[128,128], index: 3, kind: input, shape index: {}]
  %s4 = inlined_call_operand.hbm [shape: f32[128,128], index: 4, kind: input, shape index: {}]
  %s5 = inlined_call_operand.vmem [shape: f32[8,128], index: 5, kind: input, shape index: {}]
  %s6 = inlined_call_operand.hbm [shape: f32[128,128], index: 6, kind: input, shape index: {}]
  %s7 = inlined_call_operand.vmem [shape: f32[1,128], index: 7, kind: input, shape index: {}]
  %s8 = inlined_call_operand.hbm [shape: f32[8,128], index: 8, kind: output, shape index: {}]
  %s9 = sld [smem:[#allocation0]]
  $region78: #{tpu_custom_call.1} parent=0
    _
  %s11 = ssub.s32 1, %s9
  %s12 = scalar_select 0, %s11, %s9
  $region1: #{tpu_custom_call.1} parent=0
    #allocation3 [shape = 'u8[4096]{0}', space=vmem, size = 0x1000, scoped, tag = 'input window, operand 0, single buffered']
    #allocation4 [shape = 's32[1]{0}', space=sflag, size = 0x4, scoped, tag = 'scoped memory for tpu_custom_call.1']
    #allocation5 [shape = 's32[1]{0}', space=sflag, size = 0x4, scoped, tag = 'scoped memory for tpu_custom_call.1']
    #allocation6 [shape = 'u8[16384]{0}', space=vmem, size = 0x4000, scoped, tag = 'input window, operand 1, single buffered']
    #allocation7 [shape = 's32[1]{0}', space=sflag, size = 0x4, scoped, tag = 'scoped memory for tpu_custom_call.1']
    #allocation8 [shape = 'u8[4096]{0}', space=vmem, size = 0x1000, scoped, tag = 'input window, operand 2, single buffered']
    #allocation9 [shape = 'u8[65536]{0}', space=vmem, size = 0x10000, scoped, tag = 'input window, operand 3, single buffered']
    #allocation10 [shape = 's32[1]{0}', space=sflag, size = 0x4, scoped, tag = 'scoped memory for tpu_custom_call.1']
    #allocation11 [shape = 'u8[65536]{0}', space=vmem, size = 0x10000, scoped, tag = 'input window, operand 4, single buffered']
    #allocation12 [shape = 'u8[65536]{0}', space=vmem, size = 0x10000, scoped, tag = 'input window, operand 6, single buffered']
    #allocation13 [shape = 's32[1]{0}', space=sflag, size = 0x4, scoped, tag = 'scoped memory for tpu_custom_call.1']
    #allocation14 [shape = 'u8[4096]{0}', space=vmem, size = 0x1000, scoped, tag = 'output window, operand 0, single buffered']
    %13 = vsyncpa [#allocation4], 0
    %14 = vsyncpa [#allocation7], 0
    %15 = vsyncpa [#allocation10], 0
    %16 = vsyncpa [#allocation13], 0
    %17 = vsyncpa [#allocation5], 0
    // Predicated region
    $region2: #{tpu_custom_call.1} parent=1 // pred_check
      _
    $region3: #{tpu_custom_call.1} parent=1 // pred_check_branch
      %19 = sbr.rel (0) target = $region5
    $region4: #{tpu_custom_call.1} parent=1 // pred_region
      %s21 = ssub.s32 128, 128
      %22 = vsyncadd [#allocation4], %s21
      %s24 = sshll.u32 [#allocation3], 4
      %s25 = int_to_ptr.vmem [resolvable:$true] %s24
      %27 = dma.hbm_to_vmem [thread:$0]  %s0, 128, %s25, [#allocation4]
    $region5: #{tpu_custom_call.1} parent=1 // pred_fallthru
      _
    // Predicated region
    $region6: #{tpu_custom_call.1} parent=1 // pred_check
      _
    $region7: #{tpu_custom_call.1} parent=1 // pred_check_branch
      %29 = sbr.rel (0) target = $region9
    $region8: #{tpu_custom_call.1} parent=1 // pred_region
      %s31 = ssub.s32 512, 512
      %32 = vsyncadd [#allocation7], %s31
      %s33 = sshll.u32 [#allocation6], 4
      %s34 = int_to_ptr.vmem [resolvable:$true] %s33
      %39 = dma.hbm_to_vmem [thread:$0]  %s1, 512, %s34, [#allocation7], 128, 128, 8
    $region9: #{tpu_custom_call.1} parent=1 // pred_fallthru
      _
    // Predicated region
    $region10: #{tpu_custom_call.1} parent=1 // pred_check
      _
    $region11: #{tpu_custom_call.1} parent=1 // pred_check_branch
      %41 = sbr.rel (0) target = $region13
    $region12: #{tpu_custom_call.1} parent=1 // pred_region
      %s43 = ssub.s32 128, 128
      %44 = vsyncadd [#allocation7], %s43
      %s46 = sshll.u32 [#allocation8], 4
      %s47 = int_to_ptr.vmem [resolvable:$true] %s46
      %49 = dma.hbm_to_vmem [thread:$0]  %s2, 128, %s47, [#allocation7]
    $region13: #{tpu_custom_call.1} parent=1 // pred_fallthru
      _
    // Predicated region
    $region14: #{tpu_custom_call.1} parent=1 // pred_check
      _
    $region15: #{tpu_custom_call.1} parent=1 // pred_check_branch
      %51 = sbr.rel (0) target = $region17
    $region16: #{tpu_custom_call.1} parent=1 // pred_region
      %s53 = ssub.s32 2048, 2048
      %54 = vsyncadd [#allocation10], %s53
      %s55 = sshll.u32 [#allocation9], 4
      %s56 = int_to_ptr.vmem [resolvable:$true] %s55
      %61 = dma.hbm_to_vmem [thread:$0]  %s3, 2048, %s56, [#allocation10], 128, 128, 8
    $region17: #{tpu_custom_call.1} parent=1 // pred_fallthru
      _
    // Predicated region
    $region18: #{tpu_custom_call.1} parent=1 // pred_check
      _
    $region19: #{tpu_custom_call.1} parent=1 // pred_check_branch
      %63 = sbr.rel (0) target = $region21
    $region20: #{tpu_custom_call.1} parent=1 // pred_region
      %s65 = ssub.s32 2048, 2048
      %66 = vsyncadd [#allocation10], %s65
      %s67 = sshll.u32 [#allocation11], 4
      %s68 = int_to_ptr.vmem [resolvable:$true] %s67
      %73 = dma.hbm_to_vmem [thread:$0]  %s4, 2048, %s68, [#allocation10], 128, 128, 8
    $region21: #{tpu_custom_call.1} parent=1 // pred_fallthru
      _
    // Predicated region
    $region22: #{tpu_custom_call.1} parent=1 // pred_check
      _
    $region23: #{tpu_custom_call.1} parent=1 // pred_check_branch
      %75 = sbr.rel (0) target = $region25
    $region24: #{tpu_custom_call.1} parent=1 // pred_region
      _
    $region25: #{tpu_custom_call.1} parent=1 // pred_fallthru
      _
    // Predicated region
    $region26: #{tpu_custom_call.1} parent=1 // pred_check
      _
    $region27: #{tpu_custom_call.1} parent=1 // pred_check_branch
      %77 = sbr.rel (0) target = $region29
    $region28: #{tpu_custom_call.1} parent=1 // pred_region
      %s79 = ssub.s32 2048, 2048
      %80 = vsyncadd [#allocation13], %s79
      %s81 = sshll.u32 [#allocation12], 4
      %s82 = int_to_ptr.vmem [resolvable:$true] %s81
      %87 = dma.hbm_to_vmem [thread:$0]  %s6, 2048, %s82, [#allocation13], 128, 128, 8
    $region29: #{tpu_custom_call.1} parent=1 // pred_fallthru
      _
    // Predicated region
    $region30: #{tpu_custom_call.1} parent=1 // pred_check
      _
    $region31: #{tpu_custom_call.1} parent=1 // pred_check_branch
      %89 = sbr.rel (0) target = $region33
    $region32: #{tpu_custom_call.1} parent=1 // pred_region
      _
    $region33: #{tpu_custom_call.1} parent=1 // pred_fallthru
      _
    // Predicated region
    $region34: #{tpu_custom_call.1} parent=1 // pred_check
      _
    $region35: #{tpu_custom_call.1} parent=1 // pred_check_branch
      %91 = sbr.rel (0) target = $region37
    $region36: #{tpu_custom_call.1} parent=1 // pred_region
      %92 = dma.done [#allocation4], 128
    $region37: #{tpu_custom_call.1} parent=1 // pred_fallthru
      _
    // Predicated region
    $region38: #{tpu_custom_call.1} parent=1 // pred_check
      _
    $region39: #{tpu_custom_call.1} parent=1 // pred_check_branch
      %94 = sbr.rel (0) target = $region41
    $region40: #{tpu_custom_call.1} parent=1 // pred_region
      %95 = dma.done [#allocation7], 512
    $region41: #{tpu_custom_call.1} parent=1 // pred_fallthru
      _
    // Predicated region
    $region42: #{tpu_custom_call.1} parent=1 // pred_check
      _
    $region43: #{tpu_custom_call.1} parent=1 // pred_check_branch
      %97 = sbr.rel (0) target = $region45
    $region44: #{tpu_custom_call.1} parent=1 // pred_region
      %98 = dma.done [#allocation7], 128
    $region45: #{tpu_custom_call.1} parent=1 // pred_fallthru
      _
    // Predicated region
    $region46: #{tpu_custom_call.1} parent=1 // pred_check
      _
    $region47: #{tpu_custom_call.1} parent=1 // pred_check_branch
      %100 = sbr.rel (0) target = $region49
    $region48: #{tpu_custom_call.1} parent=1 // pred_region
      %101 = dma.done [#allocation10], 2048
    $region49: #{tpu_custom_call.1} parent=1 // pred_fallthru
      _
    // Predicated region
    $region50: #{tpu_custom_call.1} parent=1 // pred_check
      _
    $region51: #{tpu_custom_call.1} parent=1 // pred_check_branch
      %103 = sbr.rel (0) target = $region53
    $region52: #{tpu_custom_call.1} parent=1 // pred_region
      %104 = dma.done [#allocation10], 2048
    $region53: #{tpu_custom_call.1} parent=1 // pred_fallthru
      _
    // Predicated region
    $region54: #{tpu_custom_call.1} parent=1 // pred_check
      _
    $region55: #{tpu_custom_call.1} parent=1 // pred_check_branch
      %106 = sbr.rel (0) target = $region57
    $region56: #{tpu_custom_call.1} parent=1 // pred_region
      %107 = dma.done [#allocation13], 2048
    $region57: #{tpu_custom_call.1} parent=1 // pred_fallthru
      _
    %v108 = vld [vmem:[#allocation3] sm:$0xff]
    %v109 = vld [vmem:[#allocation6] sm:$0xff]
    %v110 = vld [vmem:[#allocation6 + $0x8] sm:$0xff]
    %v111 = vld [vmem:[#allocation6 + $0x10] sm:$0xff]
    %v112 = vld [vmem:[#allocation6 + $0x18] sm:$0xff]
    %vm113 = vcmask 261120
    %v115 = vsel %vm113, %v108, 0
    %117 = vmatprep.subr.mxu0 0.0
    %118 = vmatpush1.msra.mxu0 %v109
    %119 = vmatprep.subr.mxu0 0.0
    %120 = vmatpush1.msra.mxu0 %v110
    %121 = vmatprep.subr.mxu0 0.0
    %122 = vmatpush1.msra.mxu0 %v111
    %123 = vmatprep.subr.mxu0 0.0
    %124 = vmatpush1.msra.mxu0 %v112
    %125 = vmatprep.subr.mxu0 0.0
    %126 = vmatpush1.msra.mxu0 0.0
    %127 = vmatprep.subr.mxu0 0.0
    %128 = vmatpush1.msra.mxu0 0.0
    %129 = vmatprep.subr.mxu0 0.0
    %130 = vmatpush1.msra.mxu0 0.0
    %131 = vmatprep.subr.mxu0 0.0
    %132 = vmatpush1.msra.mxu0 0.0
    %133 = vmatprep.subr.mxu0 0.0
    %134 = vmatpush1.msra.mxu0 0.0
    %135 = vmatprep.subr.mxu0 0.0
    %136 = vmatpush1.msra.mxu0 0.0
    %137 = vmatprep.subr.mxu0 0.0
    %138 = vmatpush1.msra.mxu0 0.0
    %139 = vmatprep.subr.mxu0 0.0
    %140 = vmatpush1.msra.mxu0 0.0
    %141 = vmatprep.subr.mxu0 0.0
    %142 = vmatpush1.msra.mxu0 0.0
    %143 = vmatprep.subr.mxu0 0.0
    %144 = vmatpush1.msra.mxu0 0.0
    %145 = vmatprep.subr.mxu0 0.0
    %146 = vmatpush1.msra.mxu0 0.0
    %147 = vmatprep.subr.mxu0 0.0
    %148 = vmatpush1.msra.mxu0 0.0
    %149 = vmatprep.subr.mxu0 0.0
    %150 = vmatpush1.msra.mxu0 0.0
    %151 = vmatprep.subr.mxu0 0.0
    %152 = vmatpush1.msra.mxu0 0.0
    %153 = vmatprep.subr.mxu0 0.0
    %154 = vmatpush1.msra.mxu0 0.0
    %155 = vmatprep.subr.mxu0 0.0
    %156 = vmatpush1.msra.mxu0 0.0
    %157 = vmatprep.subr.mxu0 0.0
    %158 = vmatpush1.msra.mxu0 0.0
    %159 = vmatprep.subr.mxu0 0.0
    %160 = vmatpush1.msra.mxu0 0.0
    %161 = vmatprep.subr.mxu0 0.0
    %162 = vmatpush1.msra.mxu0 0.0
    %163 = vmatprep.subr.mxu0 0.0
    %164 = vmatpush1.msra.mxu0 0.0
    %165 = vmatprep.subr.mxu0 0.0
    %166 = vmatpush1.msra.mxu0 0.0
    %167 = vmatprep.subr.mxu0 0.0
    %168 = vmatpush1.msra.mxu0 0.0
    %169 = vmatprep.subr.mxu0 0.0
    %170 = vmatpush1.msra.mxu0 0.0
    %171 = vmatprep.subr.mxu0 0.0
    %172 = vmatpush1.msra.mxu0 0.0
    %173 = vmatprep.subr.mxu0 0.0
    %174 = vmatpush1.msra.mxu0 0.0
    %175 = vmatprep.subr.mxu0 0.0
    %176 = vmatpush1.msra.mxu0 0.0
    %177 = vmatprep.subr.mxu0 0.0
    %178 = vmatpush1.msra.mxu0 0.0
    %179 = vmatprep.subr.mxu0 0.0
    %180 = vmatpush1.msra.mxu0 0.0
    %181 = vmatprep.mubr.f32.mxu0 0.0
    %182 = vmatmul.mubr.f32.gmra.mrb[0].mxu0 %v115
    %v183 = vpop.f32.mrb[0].mxu0
    %v184 = vadd.f32 0.0, %v183
    %v185 = vpop.f32.mrb[0].mxu0
    %186 = vdwg.mxu0
    %p187 = scmp.eq.s32.totalorder 0, 0
    // Predicated region
    $region58: #{tpu_custom_call.1} parent=1 // pred_check
      %p188 = pneg %p187
    $region59: #{tpu_custom_call.1} parent=1 // pred_check_branch
      %190 = sbr.rel (%p188) target = $region61
    $region60: #{tpu_custom_call.1} parent=1 // pred_region
      %191 = vst [vmem:[#allocation2] sm:$0xff] %v184
    $region61: #{tpu_custom_call.1} parent=1 // pred_fallthru
      _
    %p192 = scmp.gt.s32.totalorder 0, 0
    // Predicated region
    $region62: #{tpu_custom_call.1} parent=1 // pred_check
      %p193 = pneg %p192
    $region63: #{tpu_custom_call.1} parent=1 // pred_check_branch
      %195 = sbr.rel (%p193) target = $region65
    $region64: #{tpu_custom_call.1} parent=1 // pred_region
      %v196 = vld [vmem:[#allocation2] sm:$0xff]
      %v197 = vadd.f32 %v196, %v184
      %198 = vst [vmem:[#allocation2] sm:$0xff] %v197
    $region65: #{tpu_custom_call.1} parent=1 // pred_fallthru
      _
    // Predicated region
    $region66: #{tpu_custom_call.1} parent=1 // pred_check
      %p199 = pneg %p187
    $region67: #{tpu_custom_call.1} parent=1 // pred_check_branch
      %201 = sbr.rel (%p199) target = $region69
    $region68: #{tpu_custom_call.1} parent=1 // pred_region
      %v202 = vld [vmem:[#allocation8] sm:$0x1]
      %v203 = vld [vmem:[#allocation8 + $0x1] sm:$0x1]
      %v204 = vld [vmem:[#allocation8 + $0x2] sm:$0x1]
      %v205 = vld [vmem:[#allocation2] sm:$0xff]
      %v206 = vlaneseq
      %v207 = vshrl.u32 %v206, 7
      %v208 = vsub.s32 0, %v207
      %v209 = vrot.slane %v202, %v208
      %v210 = vadd.f32 %v205, %v209
      %211 = vadd.xlane.f32.xlu0 %v210
      %v212 = vpop.xlane.xlu0 %211
      %v213 = vmul.f32 %v212, 0.015625
      %v214 = vsub.f32 %v210, %v213
      %v215 = vmul.f32 %v214, %v214
      %216 = vadd.xlane.f32.xlu0 %v215
      %v217 = vpop.xlane.xlu0 %216
      %v218 = vmul.f32 %v213, %v213
      %v219 = vmul.f32 %v218, 64.0
      %v220 = vsub.f32 %v217, %v219
      %v221 = vmul.f32 %v220, 0.015625
      %v222 = vadd.f32 %v221, 1e-05
      %v223 = vrsqrt.pop %v222
      %v224 = vmul.f32 %v214, %v223
      %v225 = vlaneseq
      %v226 = vshrl.u32 %v225, 7
      %v227 = vsub.s32 0, %v226
      %v228 = vrot.slane %v203, %v227
      %v229 = vmul.f32 %v224, %v228
      %v230 = vlaneseq
      %v231 = vshrl.u32 %v230, 7
      %v232 = vsub.s32 0, %v231
      %v233 = vrot.slane %v204, %v232
      %v234 = vadd.f32 %v229, %v233
      %v235 = vtanh.pop %v234
      %v236 = vld [vmem:[#allocation9] sm:$0xff]
      %v237 = vld [vmem:[#allocation9 + $0x8] sm:$0xff]
      %v238 = vld [vmem:[#allocation9 + $0x10] sm:$0xff]
      %v239 = vld [vmem:[#allocation9 + $0x18] sm:$0xff]
      %v240 = vld [vmem:[#allocation9 + $0x20] sm:$0xff]
      %v241 = vld [vmem:[#allocation9 + $0x28] sm:$0xff]
      %v242 = vld [vmem:[#allocation9 + $0x30] sm:$0xff]
      %v243 = vld [vmem:[#allocation9 + $0x38] sm:$0xff]
      %v244 = vld [vmem:[#allocation9 + $0x40] sm:$0xff]
      %v245 = vld [vmem:[#allocation9 + $0x48] sm:$0xff]
      %v246 = vld [vmem:[#allocation9 + $0x50] sm:$0xff]
      %v247 = vld [vmem:[#allocation9 + $0x58] sm:$0xff]
      %v248 = vld [vmem:[#allocation9 + $0x60] sm:$0xff]
      %v249 = vld [vmem:[#allocation9 + $0x68] sm:$0xff]
      %v250 = vld [vmem:[#allocation9 + $0x70] sm:$0xff]
      %v251 = vld [vmem:[#allocation9 + $0x78] sm:$0xff]
      %v252 = vld [vmem:[%s5] sm:$0x1]
      %v253 = vlaneseq
      %v254 = vshrl.u32 %v253, 7
      %v255 = vsub.s32 0, %v254
      %v256 = vrot.slane %v252, %v255
      %257 = vmatprep.subr.mxu0 0.0
      %258 = vmatpush1.msra.mxu0 %v236
      %259 = vmatprep.subr.mxu0 0.0
      %260 = vmatpush1.msra.mxu0 %v237
      %261 = vmatprep.subr.mxu0 0.0
      %262 = vmatpush1.msra.mxu0 %v238
      %263 = vmatprep.subr.mxu0 0.0
      %264 = vmatpush1.msra.mxu0 %v239
      %265 = vmatprep.subr.mxu0 0.0
      %266 = vmatpush1.msra.mxu0 %v240
      %267 = vmatprep.subr.mxu0 0.0
      %268 = vmatpush1.msra.mxu0 %v241
      %269 = vmatprep.subr.mxu0 0.0
      %270 = vmatpush1.msra.mxu0 %v242
      %271 = vmatprep.subr.mxu0 0.0
      %272 = vmatpush1.msra.mxu0 %v243
      %273 = vmatprep.subr.mxu0 0.0
      %274 = vmatpush1.msra.mxu0 %v244
      %275 = vmatprep.subr.mxu0 0.0
      %276 = vmatpush1.msra.mxu0 %v245
      %277 = vmatprep.subr.mxu0 0.0
      %278 = vmatpush1.msra.mxu0 %v246
      %279 = vmatprep.subr.mxu0 0.0
      %280 = vmatpush1.msra.mxu0 %v247
      %281 = vmatprep.subr.mxu0 0.0
      %282 = vmatpush1.msra.mxu0 %v248
      %283 = vmatprep.subr.mxu0 0.0
      %284 = vmatpush1.msra.mxu0 %v249
      %285 = vmatprep.subr.mxu0 0.0
      %286 = vmatpush1.msra.mxu0 %v250
      %287 = vmatprep.subr.mxu0 0.0
      %288 = vmatpush1.msra.mxu0 %v251
      %289 = vmatprep.subr.mxu0 0.0
      %290 = vmatpush1.msra.mxu0 0.0
      %291 = vmatprep.subr.mxu0 0.0
      %292 = vmatpush1.msra.mxu0 0.0
      %293 = vmatprep.subr.mxu0 0.0
      %294 = vmatpush1.msra.mxu0 0.0
      %295 = vmatprep.subr.mxu0 0.0
      %296 = vmatpush1.msra.mxu0 0.0
      %297 = vmatprep.subr.mxu0 0.0
      %298 = vmatpush1.msra.mxu0 0.0
      %299 = vmatprep.subr.mxu0 0.0
      %300 = vmatpush1.msra.mxu0 0.0
      %301 = vmatprep.subr.mxu0 0.0
      %302 = vmatpush1.msra.mxu0 0.0
      %303 = vmatprep.subr.mxu0 0.0
      %304 = vmatpush1.msra.mxu0 0.0
      %305 = vmatprep.subr.mxu0 0.0
      %306 = vmatpush1.msra.mxu0 0.0
      %307 = vmatprep.subr.mxu0 0.0
      %308 = vmatpush1.msra.mxu0 0.0
      %309 = vmatprep.subr.mxu0 0.0
      %310 = vmatpush1.msra.mxu0 0.0
      %311 = vmatprep.subr.mxu0 0.0
      %312 = vmatpush1.msra.mxu0 0.0
      %313 = vmatprep.subr.mxu0 0.0
      %314 = vmatpush1.msra.mxu0 0.0
      %315 = vmatprep.subr.mxu0 0.0
      %316 = vmatpush1.msra.mxu0 0.0
      %317 = vmatprep.subr.mxu0 0.0
      %318 = vmatpush1.msra.mxu0 0.0
      %319 = vmatprep.subr.mxu0 0.0
      %320 = vmatpush1.msra.mxu0 0.0
      %321 = vmatprep.mubr.f32.mxu0 0.0
      %322 = vmatmul.mubr.f32.gmra.mrb[0].mxu0 %v235
      %v323 = vpop.f32.mrb[0].mxu0
      %v324 = vadd.f32 %v256, %v323
      %v325 = vpop.f32.mrb[0].mxu0
      %326 = vdwg.mxu0
      %v327 = vmax.f32 %v324, 0.0
      %v328 = vld [vmem:[#allocation11] sm:$0xff]
      %v329 = vld [vmem:[#allocation11 + $0x8] sm:$0xff]
      %v330 = vld [vmem:[#allocation11 + $0x10] sm:$0xff]
      %v331 = vld [vmem:[#allocation11 + $0x18] sm:$0xff]
      %v332 = vld [vmem:[#allocation11 + $0x20] sm:$0xff]
      %v333 = vld [vmem:[#allocation11 + $0x28] sm:$0xff]
      %v334 = vld [vmem:[#allocation11 + $0x30] sm:$0xff]
      %v335 = vld [vmem:[#allocation11 + $0x38] sm:$0xff]
      %v336 = vld [vmem:[#allocation11 + $0x40] sm:$0xff]
      %v337 = vld [vmem:[#allocation11 + $0x48] sm:$0xff]
      %v338 = vld [vmem:[#allocation11 + $0x50] sm:$0xff]
      %v339 = vld [vmem:[#allocation11 + $0x58] sm:$0xff]
      %v340 = vld [vmem:[#allocation11 + $0x60] sm:$0xff]
      %v341 = vld [vmem:[#allocation11 + $0x68] sm:$0xff]
      %v342 = vld [vmem:[#allocation11 + $0x70] sm:$0xff]
      %v343 = vld [vmem:[#allocation11 + $0x78] sm:$0xff]
      %v344 = vld [vmem:[%s5 + $0x1] sm:$0x1]
      %v345 = vlaneseq
      %v346 = vshrl.u32 %v345, 7
      %v347 = vsub.s32 0, %v346
      %v348 = vrot.slane %v344, %v347
      %349 = vmatprep.subr.mxu0 0.0
      %350 = vmatpush1.msra.mxu0 %v328
      %351 = vmatprep.subr.mxu0 0.0
      %352 = vmatpush1.msra.mxu0 %v329
      %353 = vmatprep.subr.mxu0 0.0
      %354 = vmatpush1.msra.mxu0 %v330
      %355 = vmatprep.subr.mxu0 0.0
      %356 = vmatpush1.msra.mxu0 %v331
      %357 = vmatprep.subr.mxu0 0.0
      %358 = vmatpush1.msra.mxu0 %v332
      %359 = vmatprep.subr.mxu0 0.0
      %360 = vmatpush1.msra.mxu0 %v333
      %361 = vmatprep.subr.mxu0 0.0
      %362 = vmatpush1.msra.mxu0 %v334
      %363 = vmatprep.subr.mxu0 0.0
      %364 = vmatpush1.msra.mxu0 %v335
      %365 = vmatprep.subr.mxu0 0.0
      %366 = vmatpush1.msra.mxu0 %v336
      %367 = vmatprep.subr.mxu0 0.0
      %368 = vmatpush1.msra.mxu0 %v337
      %369 = vmatprep.subr.mxu0 0.0
      %370 = vmatpush1.msra.mxu0 %v338
      %371 = vmatprep.subr.mxu0 0.0
      %372 = vmatpush1.msra.mxu0 %v339
      %373 = vmatprep.subr.mxu0 0.0
      %374 = vmatpush1.msra.mxu0 %v340
      %375 = vmatprep.subr.mxu0 0.0
      %376 = vmatpush1.msra.mxu0 %v341
      %377 = vmatprep.subr.mxu0 0.0
      %378 = vmatpush1.msra.mxu0 %v342
      %379 = vmatprep.subr.mxu0 0.0
      %380 = vmatpush1.msra.mxu0 %v343
      %381 = vmatprep.subr.mxu0 0.0
      %382 = vmatpush1.msra.mxu0 0.0
      %383 = vmatprep.subr.mxu0 0.0
      %384 = vmatpush1.msra.mxu0 0.0
      %385 = vmatprep.subr.mxu0 0.0
      %386 = vmatpush1.msra.mxu0 0.0
      %387 = vmatprep.subr.mxu0 0.0
      %388 = vmatpush1.msra.mxu0 0.0
      %389 = vmatprep.subr.mxu0 0.0
      %390 = vmatpush1.msra.mxu0 0.0
      %391 = vmatprep.subr.mxu0 0.0
      %392 = vmatpush1.msra.mxu0 0.0
      %393 = vmatprep.subr.mxu0 0.0
      %394 = vmatpush1.msra.mxu0 0.0
      %395 = vmatprep.subr.mxu0 0.0
      %396 = vmatpush1.msra.mxu0 0.0
      %397 = vmatprep.subr.mxu0 0.0
      %398 = vmatpush1.msra.mxu0 0.0
      %399 = vmatprep.subr.mxu0 0.0
      %400 = vmatpush1.msra.mxu0 0.0
      %401 = vmatprep.subr.mxu0 0.0
      %402 = vmatpush1.msra.mxu0 0.0
      %403 = vmatprep.subr.mxu0 0.0
      %404 = vmatpush1.msra.mxu0 0.0
      %405 = vmatprep.subr.mxu0 0.0
      %406 = vmatpush1.msra.mxu0 0.0
      %407 = vmatprep.subr.mxu0 0.0
      %408 = vmatpush1.msra.mxu0 0.0
      %409 = vmatprep.subr.mxu0 0.0
      %410 = vmatpush1.msra.mxu0 0.0
      %411 = vmatprep.subr.mxu0 0.0
      %412 = vmatpush1.msra.mxu0 0.0
      %413 = vmatprep.mubr.f32.mxu0 0.0
      %414 = vmatmul.mubr.f32.gmra.mrb[0].mxu0 %v327
      %v415 = vpop.f32.mrb[0].mxu0
      %v416 = vadd.f32 %v348, %v415
      %v417 = vpop.f32.mrb[0].mxu0
      %418 = vdwg.mxu0
      %v419 = vmax.f32 %v416, 0.0
      %v420 = vld [vmem:[#allocation12] sm:$0xff]
      %v421 = vld [vmem:[#allocation12 + $0x8] sm:$0xff]
      %v422 = vld [vmem:[#allocation12 + $0x10] sm:$0xff]
      %v423 = vld [vmem:[#allocation12 + $0x18] sm:$0xff]
      %v424 = vld [vmem:[#allocation12 + $0x20] sm:$0xff]
      %v425 = vld [vmem:[#allocation12 + $0x28] sm:$0xff]
      %v426 = vld [vmem:[#allocation12 + $0x30] sm:$0xff]
      %v427 = vld [vmem:[#allocation12 + $0x38] sm:$0xff]
      %v428 = vld [vmem:[#allocation12 + $0x40] sm:$0xff]
      %v429 = vld [vmem:[#allocation12 + $0x48] sm:$0xff]
      %v430 = vld [vmem:[#allocation12 + $0x50] sm:$0xff]
      %v431 = vld [vmem:[#allocation12 + $0x58] sm:$0xff]
      %v432 = vld [vmem:[#allocation12 + $0x60] sm:$0xff]
      %v433 = vld [vmem:[#allocation12 + $0x68] sm:$0xff]
      %v434 = vld [vmem:[#allocation12 + $0x70] sm:$0xff]
      %v435 = vld [vmem:[#allocation12 + $0x78] sm:$0xff]
      %v436 = vld [vmem:[%s7] sm:$0x1]
      %v438 = vlaneseq
      %v439 = vshrl.u32 %v438, 7
      %v440 = vsub.s32 0, %v439
      %v441 = vrot.slane %v436, %v440
      %443 = vmatprep.subr.mxu0 0.0
      %444 = vmatpush1.msra.mxu0 %v420
      %445 = vmatprep.subr.mxu0 0.0
      %446 = vmatpush1.msra.mxu0 %v421
      %447 = vmatprep.subr.mxu0 0.0
      %448 = vmatpush1.msra.mxu0 %v422
      %449 = vmatprep.subr.mxu0 0.0
      %450 = vmatpush1.msra.mxu0 %v423
      %451 = vmatprep.subr.mxu0 0.0
      %452 = vmatpush1.msra.mxu0 %v424
      %453 = vmatprep.subr.mxu0 0.0
      %454 = vmatpush1.msra.mxu0 %v425
      %455 = vmatprep.subr.mxu0 0.0
      %456 = vmatpush1.msra.mxu0 %v426
      %457 = vmatprep.subr.mxu0 0.0
      %458 = vmatpush1.msra.mxu0 %v427
      %459 = vmatprep.subr.mxu0 0.0
      %460 = vmatpush1.msra.mxu0 %v428
      %461 = vmatprep.subr.mxu0 0.0
      %462 = vmatpush1.msra.mxu0 %v429
      %463 = vmatprep.subr.mxu0 0.0
      %464 = vmatpush1.msra.mxu0 %v430
      %465 = vmatprep.subr.mxu0 0.0
      %466 = vmatpush1.msra.mxu0 %v431
      %467 = vmatprep.subr.mxu0 0.0
      %468 = vmatpush1.msra.mxu0 %v432
      %469 = vmatprep.subr.mxu0 0.0
      %470 = vmatpush1.msra.mxu0 %v433
      %471 = vmatprep.subr.mxu0 0.0
      %472 = vmatpush1.msra.mxu0 %v434
      %473 = vmatprep.subr.mxu0 0.0
      %474 = vmatpush1.msra.mxu0 %v435
      %475 = vmatprep.subr.mxu0 0.0
      %476 = vmatpush1.msra.mxu0 0.0
      %477 = vmatprep.subr.mxu0 0.0
      %478 = vmatpush1.msra.mxu0 0.0
      %479 = vmatprep.subr.mxu0 0.0
      %480 = vmatpush1.msra.mxu0 0.0
      %481 = vmatprep.subr.mxu0 0.0
      %482 = vmatpush1.msra.mxu0 0.0
      %483 = vmatprep.subr.mxu0 0.0
      %484 = vmatpush1.msra.mxu0 0.0
      %485 = vmatprep.subr.mxu0 0.0
      %486 = vmatpush1.msra.mxu0 0.0
      %487 = vmatprep.subr.mxu0 0.0
      %488 = vmatpush1.msra.mxu0 0.0
      %489 = vmatprep.subr.mxu0 0.0
      %490 = vmatpush1.msra.mxu0 0.0
      %491 = vmatprep.subr.mxu0 0.0
      %492 = vmatpush1.msra.mxu0 0.0
      %493 = vmatprep.subr.mxu0 0.0
      %494 = vmatpush1.msra.mxu0 0.0
      %495 = vmatprep.subr.mxu0 0.0
      %496 = vmatpush1.msra.mxu0 0.0
      %497 = vmatprep.subr.mxu0 0.0
      %498 = vmatpush1.msra.mxu0 0.0
      %499 = vmatprep.subr.mxu0 0.0
      %500 = vmatpush1.msra.mxu0 0.0
      %501 = vmatprep.subr.mxu0 0.0
      %502 = vmatpush1.msra.mxu0 0.0
      %503 = vmatprep.subr.mxu0 0.0
      %504 = vmatpush1.msra.mxu0 0.0
      %505 = vmatprep.subr.mxu0 0.0
      %506 = vmatpush1.msra.mxu0 0.0
      %507 = vmatprep.mubr.f32.mxu0 0.0
      %508 = vmatmul.mubr.f32.gmra.mrb[0].mxu0 %v419
      %v509 = vpop.f32.mrb[0].mxu0
      %v510 = vadd.f32 %v441, %v509
      %v511 = vpop.f32.mrb[0].mxu0
      %512 = vdwg.mxu0
      %v513 = vtanh.pop %v510
      %514 = vst [vmem:[#allocation14] sm:$0xff] %v513
    $region69: #{tpu_custom_call.1} parent=1 // pred_fallthru
      _
    // Predicated region
    $region70: #{tpu_custom_call.1} parent=1 // pred_check
      _
    $region71: #{tpu_custom_call.1} parent=1 // pred_check_branch
      %516 = sbr.rel (0) target = $region73
    $region72: #{tpu_custom_call.1} parent=1 // pred_region
      %s518 = ssub.s32 128, 128
      %519 = vsyncadd [#allocation5], %s518
      %s521 = sshll.u32 [#allocation14], 4
      %s522 = int_to_ptr.vmem [resolvable:$true] %s521
      %524 = dma.vmem_to_hbm [thread:$0]  %s522, 128, %s8, [#allocation5]
    $region73: #{tpu_custom_call.1} parent=1 // pred_fallthru
      _
    // Predicated region
    $region74: #{tpu_custom_call.1} parent=1 // pred_check
      _
    $region75: #{tpu_custom_call.1} parent=1 // pred_check_branch
      %526 = sbr.rel (0) target = $region77
    $region76: #{tpu_custom_call.1} parent=1 // pred_region
      %527 = dma.done [#allocation5], 128
    $region77: #{tpu_custom_call.1} parent=1 // pred_fallthru
      _
    %528 = vsyncpa [#allocation4], 1
    %529 = vsyncpa [#allocation7], 1
    %530 = vsyncpa [#allocation10], 1
    %531 = vsyncpa [#allocation13], 1
    %532 = vsyncpa [#allocation5], 1

// kernel: tpu_custom_call.1
$region0: #{tpu_custom_call.1}
  #allocation0 [shape = 'u32[]', space=smem, size = 0x4, offset = 0x4, fixed_abs, tag = 'smem constant byte address 0x4 - core index']
  #allocation1 [shape = 'u32[144,128]{1,0:T(1,128)}', space=vmem, size = 0x12000, scoped, tag = 'internal scratch']
  #allocation2 [shape = 'f32[8,128]{1,0:T(8,128)}', space=vmem, size = 0x1000, scoped, tag = 'scratch operand']
  %s0 = inlined_call_operand.hbm [shape: f32[8,32], index: 0, kind: input, shape index: {}]
  %s1 = inlined_call_operand.hbm [shape: f32[32,128], index: 1, kind: input, shape index: {}]
  %s2 = inlined_call_operand.hbm [shape: f32[8,128], index: 2, kind: input, shape index: {}]
  %s3 = inlined_call_operand.hbm [shape: f32[128,128], index: 3, kind: input, shape index: {}]
  %s4 = inlined_call_operand.hbm [shape: f32[128,128], index: 4, kind: input, shape index: {}]
  %s5 = inlined_call_operand.vmem [shape: f32[8,128], index: 5, kind: input, shape index: {}]
  %s6 = inlined_call_operand.hbm [shape: f32[128,128], index: 6, kind: input, shape index: {}]
  %s7 = inlined_call_operand.vmem [shape: f32[1,128], index: 7, kind: input, shape index: {}]
  %s8 = inlined_call_operand.hbm [shape: f32[8,128], index: 8, kind: output, shape index: {}]
  %s9 = sld [smem:[#allocation0]]
  $region78: #{tpu_custom_call.1} parent=0
    _
  %s11 = ssub.s32 1, %s9
  %s12 = scalar_select 0, %s11, %s9
  $region1: #{tpu_custom_call.1} parent=0
    #allocation3 [shape = 'u8[4096]{0}', space=vmem, size = 0x1000, scoped, tag = 'input window, operand 0, single buffered']
    #allocation4 [shape = 's32[1]{0}', space=sflag, size = 0x4, scoped, tag = 'scoped memory for tpu_custom_call.1']
    #allocation5 [shape = 's32[1]{0}', space=sflag, size = 0x4, scoped, tag = 'scoped memory for tpu_custom_call.1']
    #allocation6 [shape = 'u8[16384]{0}', space=vmem, size = 0x4000, scoped, tag = 'input window, operand 1, single buffered']
    #allocation7 [shape = 's32[1]{0}', space=sflag, size = 0x4, scoped, tag = 'scoped memory for tpu_custom_call.1']
    #allocation8 [shape = 'u8[4096]{0}', space=vmem, size = 0x1000, scoped, tag = 'input window, operand 2, single buffered']
    #allocation9 [shape = 'u8[65536]{0}', space=vmem, size = 0x10000, scoped, tag = 'input window, operand 3, single buffered']
    #allocation10 [shape = 's32[1]{0}', space=sflag, size = 0x4, scoped, tag = 'scoped memory for tpu_custom_call.1']
    #allocation11 [shape = 'u8[65536]{0}', space=vmem, size = 0x10000, scoped, tag = 'input window, operand 4, single buffered']
    #allocation12 [shape = 'u8[65536]{0}', space=vmem, size = 0x10000, scoped, tag = 'input window, operand 6, single buffered']
    #allocation13 [shape = 's32[1]{0}', space=sflag, size = 0x4, scoped, tag = 'scoped memory for tpu_custom_call.1']
    #allocation14 [shape = 'u8[4096]{0}', space=vmem, size = 0x1000, scoped, tag = 'output window, operand 0, single buffered']
    %13 = vsyncpa [#allocation4], 0
    %14 = vsyncpa [#allocation7], 0
    %15 = vsyncpa [#allocation10], 0
    %16 = vsyncpa [#allocation13], 0
    %17 = vsyncpa [#allocation5], 0
    // Predicated region
    $region2: #{tpu_custom_call.1} parent=1 // pred_check
      _
    $region3: #{tpu_custom_call.1} parent=1 // pred_check_branch
      %19 = sbr.rel (0) target = $region5
    $region4: #{tpu_custom_call.1} parent=1 // pred_region
      %s21 = ssub.s32 128, 128
      %22 = vsyncadd [#allocation4], %s21
      %s24 = sshll.u32 [#allocation3], 4
      %s25 = int_to_ptr.vmem [resolvable:$true] %s24
      %27 = dma.hbm_to_vmem [thread:$0]  %s0, 128, %s25, [#allocation4]
    $region5: #{tpu_custom_call.1} parent=1 // pred_fallthru
      _
    // Predicated region
    $region6: #{tpu_custom_call.1} parent=1 // pred_check
      _
    $region7: #{tpu_custom_call.1} parent=1 // pred_check_branch
      %29 = sbr.rel (0) target = $region9
    $region8: #{tpu_custom_call.1} parent=1 // pred_region
      %s31 = ssub.s32 512, 512
      %32 = vsyncadd [#allocation7], %s31
      %s33 = sshll.u32 [#allocation6], 4
      %s34 = int_to_ptr.vmem [resolvable:$true] %s33
      %39 = dma.hbm_to_vmem [thread:$0]  %s1, 512, %s34, [#allocation7], 128, 128, 8
    $region9: #{tpu_custom_call.1} parent=1 // pred_fallthru
      _
    // Predicated region
    $region10: #{tpu_custom_call.1} parent=1 // pred_check
      _
    $region11: #{tpu_custom_call.1} parent=1 // pred_check_branch
      %41 = sbr.rel (0) target = $region13
    $region12: #{tpu_custom_call.1} parent=1 // pred_region
      %s43 = ssub.s32 128, 128
      %44 = vsyncadd [#allocation7], %s43
      %s46 = sshll.u32 [#allocation8], 4
      %s47 = int_to_ptr.vmem [resolvable:$true] %s46
      %49 = dma.hbm_to_vmem [thread:$0]  %s2, 128, %s47, [#allocation7]
    $region13: #{tpu_custom_call.1} parent=1 // pred_fallthru
      _
    // Predicated region
    $region14: #{tpu_custom_call.1} parent=1 // pred_check
      _
    $region15: #{tpu_custom_call.1} parent=1 // pred_check_branch
      %51 = sbr.rel (0) target = $region17
    $region16: #{tpu_custom_call.1} parent=1 // pred_region
      %s53 = ssub.s32 2048, 2048
      %54 = vsyncadd [#allocation10], %s53
      %s55 = sshll.u32 [#allocation9], 4
      %s56 = int_to_ptr.vmem [resolvable:$true] %s55
      %61 = dma.hbm_to_vmem [thread:$0]  %s3, 2048, %s56, [#allocation10], 128, 128, 8
    $region17: #{tpu_custom_call.1} parent=1 // pred_fallthru
      _
    // Predicated region
    $region18: #{tpu_custom_call.1} parent=1 // pred_check
      _
    $region19: #{tpu_custom_call.1} parent=1 // pred_check_branch
      %63 = sbr.rel (0) target = $region21
    $region20: #{tpu_custom_call.1} parent=1 // pred_region
      %s65 = ssub.s32 2048, 2048
      %66 = vsyncadd [#allocation10], %s65
      %s67 = sshll.u32 [#allocation11], 4
      %s68 = int_to_ptr.vmem [resolvable:$true] %s67
      %73 = dma.hbm_to_vmem [thread:$0]  %s4, 2048, %s68, [#allocation10], 128, 128, 8
    $region21: #{tpu_custom_call.1} parent=1 // pred_fallthru
      _
    // Predicated region
    $region22: #{tpu_custom_call.1} parent=1 // pred_check
      _
    $region23: #{tpu_custom_call.1} parent=1 // pred_check_branch
      %75 = sbr.rel (0) target = $region25
    $region24: #{tpu_custom_call.1} parent=1 // pred_region
      _
    $region25: #{tpu_custom_call.1} parent=1 // pred_fallthru
      _
    // Predicated region
    $region26: #{tpu_custom_call.1} parent=1 // pred_check
      _
    $region27: #{tpu_custom_call.1} parent=1 // pred_check_branch
      %77 = sbr.rel (0) target = $region29
    $region28: #{tpu_custom_call.1} parent=1 // pred_region
      %s79 = ssub.s32 2048, 2048
      %80 = vsyncadd [#allocation13], %s79
      %s81 = sshll.u32 [#allocation12], 4
      %s82 = int_to_ptr.vmem [resolvable:$true] %s81
      %87 = dma.hbm_to_vmem [thread:$0]  %s6, 2048, %s82, [#allocation13], 128, 128, 8
    $region29: #{tpu_custom_call.1} parent=1 // pred_fallthru
      _
    // Predicated region
    $region30: #{tpu_custom_call.1} parent=1 // pred_check
      _
    $region31: #{tpu_custom_call.1} parent=1 // pred_check_branch
      %89 = sbr.rel (0) target = $region33
    $region32: #{tpu_custom_call.1} parent=1 // pred_region
      _
    $region33: #{tpu_custom_call.1} parent=1 // pred_fallthru
      _
    // Predicated region
    $region34: #{tpu_custom_call.1} parent=1 // pred_check
      _
    $region35: #{tpu_custom_call.1} parent=1 // pred_check_branch
      %91 = sbr.rel (0) target = $region37
    $region36: #{tpu_custom_call.1} parent=1 // pred_region
      %92 = dma.done [#allocation4], 128
    $region37: #{tpu_custom_call.1} parent=1 // pred_fallthru
      _
    // Predicated region
    $region38: #{tpu_custom_call.1} parent=1 // pred_check
      _
    $region39: #{tpu_custom_call.1} parent=1 // pred_check_branch
      %94 = sbr.rel (0) target = $region41
    $region40: #{tpu_custom_call.1} parent=1 // pred_region
      %95 = dma.done [#allocation7], 512
    $region41: #{tpu_custom_call.1} parent=1 // pred_fallthru
      _
    // Predicated region
    $region42: #{tpu_custom_call.1} parent=1 // pred_check
      _
    $region43: #{tpu_custom_call.1} parent=1 // pred_check_branch
      %97 = sbr.rel (0) target = $region45
    $region44: #{tpu_custom_call.1} parent=1 // pred_region
      %98 = dma.done [#allocation7], 128
    $region45: #{tpu_custom_call.1} parent=1 // pred_fallthru
      _
    // Predicated region
    $region46: #{tpu_custom_call.1} parent=1 // pred_check
      _
    $region47: #{tpu_custom_call.1} parent=1 // pred_check_branch
      %100 = sbr.rel (0) target = $region49
    $region48: #{tpu_custom_call.1} parent=1 // pred_region
      %101 = dma.done [#allocation10], 2048
    $region49: #{tpu_custom_call.1} parent=1 // pred_fallthru
      _
    // Predicated region
    $region50: #{tpu_custom_call.1} parent=1 // pred_check
      _
    $region51: #{tpu_custom_call.1} parent=1 // pred_check_branch
      %103 = sbr.rel (0) target = $region53
    $region52: #{tpu_custom_call.1} parent=1 // pred_region
      %104 = dma.done [#allocation10], 2048
    $region53: #{tpu_custom_call.1} parent=1 // pred_fallthru
      _
    // Predicated region
    $region54: #{tpu_custom_call.1} parent=1 // pred_check
      _
    $region55: #{tpu_custom_call.1} parent=1 // pred_check_branch
      %106 = sbr.rel (0) target = $region57
    $region56: #{tpu_custom_call.1} parent=1 // pred_region
      %107 = dma.done [#allocation13], 2048
    $region57: #{tpu_custom_call.1} parent=1 // pred_fallthru
      _
    %v108 = vld [vmem:[#allocation3] sm:$0xff]
    %v109 = vld [vmem:[#allocation6] sm:$0xff]
    %v110 = vld [vmem:[#allocation6 + $0x8] sm:$0xff]
    %v111 = vld [vmem:[#allocation6 + $0x10] sm:$0xff]
    %v112 = vld [vmem:[#allocation6 + $0x18] sm:$0xff]
    %vm113 = vcmask 261120
    %v115 = vsel %vm113, %v108, 0
    %117 = vmatprep.subr.mxu0 0.0
    %118 = vmatpush1.msra.mxu0 %v109
    %119 = vmatprep.subr.mxu0 0.0
    %120 = vmatpush1.msra.mxu0 %v110
    %121 = vmatprep.subr.mxu0 0.0
    %122 = vmatpush1.msra.mxu0 %v111
    %123 = vmatprep.subr.mxu0 0.0
    %124 = vmatpush1.msra.mxu0 %v112
    %125 = vmatprep.subr.mxu0 0.0
    %126 = vmatpush1.msra.mxu0 0.0
    %127 = vmatprep.subr.mxu0 0.0
    %128 = vmatpush1.msra.mxu0 0.0
    %129 = vmatprep.subr.mxu0 0.0
    %130 = vmatpush1.msra.mxu0 0.0
    %131 = vmatprep.subr.mxu0 0.0
    %132 = vmatpush1.msra.mxu0 0.0
    %133 = vmatprep.subr.mxu0 0.0
    %134 = vmatpush1.msra.mxu0 0.0
    %135 = vmatprep.subr.mxu0 0.0
    %136 = vmatpush1.msra.mxu0 0.0
    %137 = vmatprep.subr.mxu0 0.0
    %138 = vmatpush1.msra.mxu0 0.0
    %139 = vmatprep.subr.mxu0 0.0
    %140 = vmatpush1.msra.mxu0 0.0
    %141 = vmatprep.subr.mxu0 0.0
    %142 = vmatpush1.msra.mxu0 0.0
    %143 = vmatprep.subr.mxu0 0.0
    %144 = vmatpush1.msra.mxu0 0.0
    %145 = vmatprep.subr.mxu0 0.0
    %146 = vmatpush1.msra.mxu0 0.0
    %147 = vmatprep.subr.mxu0 0.0
    %148 = vmatpush1.msra.mxu0 0.0
    %149 = vmatprep.subr.mxu0 0.0
    %150 = vmatpush1.msra.mxu0 0.0
    %151 = vmatprep.subr.mxu0 0.0
    %152 = vmatpush1.msra.mxu0 0.0
    %153 = vmatprep.subr.mxu0 0.0
    %154 = vmatpush1.msra.mxu0 0.0
    %155 = vmatprep.subr.mxu0 0.0
    %156 = vmatpush1.msra.mxu0 0.0
    %157 = vmatprep.subr.mxu0 0.0
    %158 = vmatpush1.msra.mxu0 0.0
    %159 = vmatprep.subr.mxu0 0.0
    %160 = vmatpush1.msra.mxu0 0.0
    %161 = vmatprep.subr.mxu0 0.0
    %162 = vmatpush1.msra.mxu0 0.0
    %163 = vmatprep.subr.mxu0 0.0
    %164 = vmatpush1.msra.mxu0 0.0
    %165 = vmatprep.subr.mxu0 0.0
    %166 = vmatpush1.msra.mxu0 0.0
    %167 = vmatprep.subr.mxu0 0.0
    %168 = vmatpush1.msra.mxu0 0.0
    %169 = vmatprep.subr.mxu0 0.0
    %170 = vmatpush1.msra.mxu0 0.0
    %171 = vmatprep.subr.mxu0 0.0
    %172 = vmatpush1.msra.mxu0 0.0
    %173 = vmatprep.subr.mxu0 0.0
    %174 = vmatpush1.msra.mxu0 0.0
    %175 = vmatprep.subr.mxu0 0.0
    %176 = vmatpush1.msra.mxu0 0.0
    %177 = vmatprep.subr.mxu0 0.0
    %178 = vmatpush1.msra.mxu0 0.0
    %179 = vmatprep.subr.mxu0 0.0
    %180 = vmatpush1.msra.mxu0 0.0
    %181 = vmatprep.mubr.f32.mxu0 0.0
    %182 = vmatmul.mubr.f32.gmra.mrb[0].mxu0 %v115
    %v183 = vpop.f32.mrb[0].mxu0
    %v184 = vadd.f32 0.0, %v183
    %v185 = vpop.f32.mrb[0].mxu0
    %186 = vdwg.mxu0
    %p187 = scmp.eq.s32.totalorder 0, 0
    // Predicated region
    $region58: #{tpu_custom_call.1} parent=1 // pred_check
      %p188 = pneg %p187
    $region59: #{tpu_custom_call.1} parent=1 // pred_check_branch
      %190 = sbr.rel (%p188) target = $region61
    $region60: #{tpu_custom_call.1} parent=1 // pred_region
      %191 = vst [vmem:[#allocation2] sm:$0xff] %v184
    $region61: #{tpu_custom_call.1} parent=1 // pred_fallthru
      _
    %p192 = scmp.gt.s32.totalorder 0, 0
    // Predicated region
    $region62: #{tpu_custom_call.1} parent=1 // pred_check
      %p193 = pneg %p192
    $region63: #{tpu_custom_call.1} parent=1 // pred_check_branch
      %195 = sbr.rel (%p193) target = $region65
    $region64: #{tpu_custom_call.1} parent=1 // pred_region
      %v196 = vld [vmem:[#allocation2] sm:$0xff]
      %v197 = vadd.f32 %v196, %v184
      %198 = vst [vmem:[#allocation2] sm:$0xff] %v197
    $region65: #{tpu_custom_call.1} parent=1 // pred_fallthru
      _
    // Predicated region
    $region66: #{tpu_custom_call.1} parent=1 // pred_check
      %p199 = pneg %p187
    $region67: #{tpu_custom_call.1} parent=1 // pred_check_branch
      %201 = sbr.rel (%p199) target = $region69
    $region68: #{tpu_custom_call.1} parent=1 // pred_region
      %v202 = vld [vmem:[#allocation8] sm:$0x1]
      %v203 = vld [vmem:[#allocation8 + $0x1] sm:$0x1]
      %v204 = vld [vmem:[#allocation8 + $0x2] sm:$0x1]
      %v205 = vld [vmem:[#allocation2] sm:$0xff]
      %v206 = vlaneseq
      %v207 = vshrl.u32 %v206, 7
      %v208 = vsub.s32 0, %v207
      %v209 = vrot.slane %v202, %v208
      %v210 = vadd.f32 %v205, %v209
      %211 = vadd.xlane.f32.xlu0 %v210
      %v212 = vpop.xlane.xlu0 %211
      %v213 = vmul.f32 %v212, 0.015625
      %v214 = vsub.f32 %v210, %v213
      %v215 = vmul.f32 %v214, %v214
      %216 = vadd.xlane.f32.xlu0 %v215
      %v217 = vpop.xlane.xlu0 %216
      %v218 = vmul.f32 %v213, %v213
      %v219 = vmul.f32 %v218, 64.0
      %v220 = vsub.f32 %v217, %v219
      %v221 = vmul.f32 %v220, 0.015625
      %v222 = vadd.f32 %v221, 1e-05
      %v223 = vrsqrt.pop %v222
      %v224 = vmul.f32 %v214, %v223
      %v225 = vlaneseq
      %v226 = vshrl.u32 %v225, 7
      %v227 = vsub.s32 0, %v226
      %v228 = vrot.slane %v203, %v227
      %v229 = vmul.f32 %v224, %v228
      %v230 = vlaneseq
      %v231 = vshrl.u32 %v230, 7
      %v232 = vsub.s32 0, %v231
      %v233 = vrot.slane %v204, %v232
      %v234 = vadd.f32 %v229, %v233
      %v235 = vtanh.pop %v234
      %v236 = vld [vmem:[#allocation9] sm:$0xff]
      %v237 = vld [vmem:[#allocation9 + $0x8] sm:$0xff]
      %v238 = vld [vmem:[#allocation9 + $0x10] sm:$0xff]
      %v239 = vld [vmem:[#allocation9 + $0x18] sm:$0xff]
      %v240 = vld [vmem:[#allocation9 + $0x20] sm:$0xff]
      %v241 = vld [vmem:[#allocation9 + $0x28] sm:$0xff]
      %v242 = vld [vmem:[#allocation9 + $0x30] sm:$0xff]
      %v243 = vld [vmem:[#allocation9 + $0x38] sm:$0xff]
      %v244 = vld [vmem:[#allocation9 + $0x40] sm:$0xff]
      %v245 = vld [vmem:[#allocation9 + $0x48] sm:$0xff]
      %v246 = vld [vmem:[#allocation9 + $0x50] sm:$0xff]
      %v247 = vld [vmem:[#allocation9 + $0x58] sm:$0xff]
      %v248 = vld [vmem:[#allocation9 + $0x60] sm:$0xff]
      %v249 = vld [vmem:[#allocation9 + $0x68] sm:$0xff]
      %v250 = vld [vmem:[#allocation9 + $0x70] sm:$0xff]
      %v251 = vld [vmem:[#allocation9 + $0x78] sm:$0xff]
      %v252 = vld [vmem:[%s5] sm:$0x1]
      %v253 = vlaneseq
      %v254 = vshrl.u32 %v253, 7
      %v255 = vsub.s32 0, %v254
      %v256 = vrot.slane %v252, %v255
      %257 = vmatprep.subr.mxu0 0.0
      %258 = vmatpush1.msra.mxu0 %v236
      %259 = vmatprep.subr.mxu0 0.0
      %260 = vmatpush1.msra.mxu0 %v237
      %261 = vmatprep.subr.mxu0 0.0
      %262 = vmatpush1.msra.mxu0 %v238
      %263 = vmatprep.subr.mxu0 0.0
      %264 = vmatpush1.msra.mxu0 %v239
      %265 = vmatprep.subr.mxu0 0.0
      %266 = vmatpush1.msra.mxu0 %v240
      %267 = vmatprep.subr.mxu0 0.0
      %268 = vmatpush1.msra.mxu0 %v241
      %269 = vmatprep.subr.mxu0 0.0
      %270 = vmatpush1.msra.mxu0 %v242
      %271 = vmatprep.subr.mxu0 0.0
      %272 = vmatpush1.msra.mxu0 %v243
      %273 = vmatprep.subr.mxu0 0.0
      %274 = vmatpush1.msra.mxu0 %v244
      %275 = vmatprep.subr.mxu0 0.0
      %276 = vmatpush1.msra.mxu0 %v245
      %277 = vmatprep.subr.mxu0 0.0
      %278 = vmatpush1.msra.mxu0 %v246
      %279 = vmatprep.subr.mxu0 0.0
      %280 = vmatpush1.msra.mxu0 %v247
      %281 = vmatprep.subr.mxu0 0.0
      %282 = vmatpush1.msra.mxu0 %v248
      %283 = vmatprep.subr.mxu0 0.0
      %284 = vmatpush1.msra.mxu0 %v249
      %285 = vmatprep.subr.mxu0 0.0
      %286 = vmatpush1.msra.mxu0 %v250
      %287 = vmatprep.subr.mxu0 0.0
      %288 = vmatpush1.msra.mxu0 %v251
      %289 = vmatprep.subr.mxu0 0.0
      %290 = vmatpush1.msra.mxu0 0.0
      %291 = vmatprep.subr.mxu0 0.0
      %292 = vmatpush1.msra.mxu0 0.0
      %293 = vmatprep.subr.mxu0 0.0
      %294 = vmatpush1.msra.mxu0 0.0
      %295 = vmatprep.subr.mxu0 0.0
      %296 = vmatpush1.msra.mxu0 0.0
      %297 = vmatprep.subr.mxu0 0.0
      %298 = vmatpush1.msra.mxu0 0.0
      %299 = vmatprep.subr.mxu0 0.0
      %300 = vmatpush1.msra.mxu0 0.0
      %301 = vmatprep.subr.mxu0 0.0
      %302 = vmatpush1.msra.mxu0 0.0
      %303 = vmatprep.subr.mxu0 0.0
      %304 = vmatpush1.msra.mxu0 0.0
      %305 = vmatprep.subr.mxu0 0.0
      %306 = vmatpush1.msra.mxu0 0.0
      %307 = vmatprep.subr.mxu0 0.0
      %308 = vmatpush1.msra.mxu0 0.0
      %309 = vmatprep.subr.mxu0 0.0
      %310 = vmatpush1.msra.mxu0 0.0
      %311 = vmatprep.subr.mxu0 0.0
      %312 = vmatpush1.msra.mxu0 0.0
      %313 = vmatprep.subr.mxu0 0.0
      %314 = vmatpush1.msra.mxu0 0.0
      %315 = vmatprep.subr.mxu0 0.0
      %316 = vmatpush1.msra.mxu0 0.0
      %317 = vmatprep.subr.mxu0 0.0
      %318 = vmatpush1.msra.mxu0 0.0
      %319 = vmatprep.subr.mxu0 0.0
      %320 = vmatpush1.msra.mxu0 0.0
      %321 = vmatprep.mubr.f32.mxu0 0.0
      %322 = vmatmul.mubr.f32.gmra.mrb[0].mxu0 %v235
      %v323 = vpop.f32.mrb[0].mxu0
      %v324 = vadd.f32 %v256, %v323
      %v325 = vpop.f32.mrb[0].mxu0
      %326 = vdwg.mxu0
      %v327 = vmax.f32 %v324, 0.0
      %v328 = vld [vmem:[#allocation11] sm:$0xff]
      %v329 = vld [vmem:[#allocation11 + $0x8] sm:$0xff]
      %v330 = vld [vmem:[#allocation11 + $0x10] sm:$0xff]
      %v331 = vld [vmem:[#allocation11 + $0x18] sm:$0xff]
      %v332 = vld [vmem:[#allocation11 + $0x20] sm:$0xff]
      %v333 = vld [vmem:[#allocation11 + $0x28] sm:$0xff]
      %v334 = vld [vmem:[#allocation11 + $0x30] sm:$0xff]
      %v335 = vld [vmem:[#allocation11 + $0x38] sm:$0xff]
      %v336 = vld [vmem:[#allocation11 + $0x40] sm:$0xff]
      %v337 = vld [vmem:[#allocation11 + $0x48] sm:$0xff]
      %v338 = vld [vmem:[#allocation11 + $0x50] sm:$0xff]
      %v339 = vld [vmem:[#allocation11 + $0x58] sm:$0xff]
      %v340 = vld [vmem:[#allocation11 + $0x60] sm:$0xff]
      %v341 = vld [vmem:[#allocation11 + $0x68] sm:$0xff]
      %v342 = vld [vmem:[#allocation11 + $0x70] sm:$0xff]
      %v343 = vld [vmem:[#allocation11 + $0x78] sm:$0xff]
      %v344 = vld [vmem:[%s5 + $0x1] sm:$0x1]
      %v345 = vlaneseq
      %v346 = vshrl.u32 %v345, 7
      %v347 = vsub.s32 0, %v346
      %v348 = vrot.slane %v344, %v347
      %349 = vmatprep.subr.mxu0 0.0
      %350 = vmatpush1.msra.mxu0 %v328
      %351 = vmatprep.subr.mxu0 0.0
      %352 = vmatpush1.msra.mxu0 %v329
      %353 = vmatprep.subr.mxu0 0.0
      %354 = vmatpush1.msra.mxu0 %v330
      %355 = vmatprep.subr.mxu0 0.0
      %356 = vmatpush1.msra.mxu0 %v331
      %357 = vmatprep.subr.mxu0 0.0
      %358 = vmatpush1.msra.mxu0 %v332
      %359 = vmatprep.subr.mxu0 0.0
      %360 = vmatpush1.msra.mxu0 %v333
      %361 = vmatprep.subr.mxu0 0.0
      %362 = vmatpush1.msra.mxu0 %v334
      %363 = vmatprep.subr.mxu0 0.0
      %364 = vmatpush1.msra.mxu0 %v335
      %365 = vmatprep.subr.mxu0 0.0
      %366 = vmatpush1.msra.mxu0 %v336
      %367 = vmatprep.subr.mxu0 0.0
      %368 = vmatpush1.msra.mxu0 %v337
      %369 = vmatprep.subr.mxu0 0.0
      %370 = vmatpush1.msra.mxu0 %v338
      %371 = vmatprep.subr.mxu0 0.0
      %372 = vmatpush1.msra.mxu0 %v339
      %373 = vmatprep.subr.mxu0 0.0
      %374 = vmatpush1.msra.mxu0 %v340
      %375 = vmatprep.subr.mxu0 0.0
      %376 = vmatpush1.msra.mxu0 %v341
      %377 = vmatprep.subr.mxu0 0.0
      %378 = vmatpush1.msra.mxu0 %v342
      %379 = vmatprep.subr.mxu0 0.0
      %380 = vmatpush1.msra.mxu0 %v343
      %381 = vmatprep.subr.mxu0 0.0
      %382 = vmatpush1.msra.mxu0 0.0
      %383 = vmatprep.subr.mxu0 0.0
      %384 = vmatpush1.msra.mxu0 0.0
      %385 = vmatprep.subr.mxu0 0.0
      %386 = vmatpush1.msra.mxu0 0.0
      %387 = vmatprep.subr.mxu0 0.0
      %388 = vmatpush1.msra.mxu0 0.0
      %389 = vmatprep.subr.mxu0 0.0
      %390 = vmatpush1.msra.mxu0 0.0
      %391 = vmatprep.subr.mxu0 0.0
      %392 = vmatpush1.msra.mxu0 0.0
      %393 = vmatprep.subr.mxu0 0.0
      %394 = vmatpush1.msra.mxu0 0.0
      %395 = vmatprep.subr.mxu0 0.0
      %396 = vmatpush1.msra.mxu0 0.0
      %397 = vmatprep.subr.mxu0 0.0
      %398 = vmatpush1.msra.mxu0 0.0
      %399 = vmatprep.subr.mxu0 0.0
      %400 = vmatpush1.msra.mxu0 0.0
      %401 = vmatprep.subr.mxu0 0.0
      %402 = vmatpush1.msra.mxu0 0.0
      %403 = vmatprep.subr.mxu0 0.0
      %404 = vmatpush1.msra.mxu0 0.0
      %405 = vmatprep.subr.mxu0 0.0
      %406 = vmatpush1.msra.mxu0 0.0
      %407 = vmatprep.subr.mxu0 0.0
      %408 = vmatpush1.msra.mxu0 0.0
      %409 = vmatprep.subr.mxu0 0.0
      %410 = vmatpush1.msra.mxu0 0.0
      %411 = vmatprep.subr.mxu0 0.0
      %412 = vmatpush1.msra.mxu0 0.0
      %413 = vmatprep.mubr.f32.mxu0 0.0
      %414 = vmatmul.mubr.f32.gmra.mrb[0].mxu0 %v327
      %v415 = vpop.f32.mrb[0].mxu0
      %v416 = vadd.f32 %v348, %v415
      %v417 = vpop.f32.mrb[0].mxu0
      %418 = vdwg.mxu0
      %v419 = vmax.f32 %v416, 0.0
      %v420 = vld [vmem:[#allocation12] sm:$0xff]
      %v421 = vld [vmem:[#allocation12 + $0x8] sm:$0xff]
      %v422 = vld [vmem:[#allocation12 + $0x10] sm:$0xff]
      %v423 = vld [vmem:[#allocation12 + $0x18] sm:$0xff]
      %v424 = vld [vmem:[#allocation12 + $0x20] sm:$0xff]
      %v425 = vld [vmem:[#allocation12 + $0x28] sm:$0xff]
      %v426 = vld [vmem:[#allocation12 + $0x30] sm:$0xff]
      %v427 = vld [vmem:[#allocation12 + $0x38] sm:$0xff]
      %v428 = vld [vmem:[#allocation12 + $0x40] sm:$0xff]
      %v429 = vld [vmem:[#allocation12 + $0x48] sm:$0xff]
      %v430 = vld [vmem:[#allocation12 + $0x50] sm:$0xff]
      %v431 = vld [vmem:[#allocation12 + $0x58] sm:$0xff]
      %v432 = vld [vmem:[#allocation12 + $0x60] sm:$0xff]
      %v433 = vld [vmem:[#allocation12 + $0x68] sm:$0xff]
      %v434 = vld [vmem:[#allocation12 + $0x70] sm:$0xff]
      %v435 = vld [vmem:[#allocation12 + $0x78] sm:$0xff]
      %v436 = vld [vmem:[%s7] sm:$0x1]
      %v438 = vlaneseq
      %v439 = vshrl.u32 %v438, 7
      %v440 = vsub.s32 0, %v439
      %v441 = vrot.slane %v436, %v440
      %443 = vmatprep.subr.mxu0 0.0
      %444 = vmatpush1.msra.mxu0 %v420
      %445 = vmatprep.subr.mxu0 0.0
      %446 = vmatpush1.msra.mxu0 %v421
      %447 = vmatprep.subr.mxu0 0.0
      %448 = vmatpush1.msra.mxu0 %v422
      %449 = vmatprep.subr.mxu0 0.0
      %450 = vmatpush1.msra.mxu0 %v423
      %451 = vmatprep.subr.mxu0 0.0
      %452 = vmatpush1.msra.mxu0 %v424
      %453 = vmatprep.subr.mxu0 0.0
      %454 = vmatpush1.msra.mxu0 %v425
      %455 = vmatprep.subr.mxu0 0.0
      %456 = vmatpush1.msra.mxu0 %v426
      %457 = vmatprep.subr.mxu0 0.0
      %458 = vmatpush1.msra.mxu0 %v427
      %459 = vmatprep.subr.mxu0 0.0
      %460 = vmatpush1.msra.mxu0 %v428
      %461 = vmatprep.subr.mxu0 0.0
      %462 = vmatpush1.msra.mxu0 %v429
      %463 = vmatprep.subr.mxu0 0.0
      %464 = vmatpush1.msra.mxu0 %v430
      %465 = vmatprep.subr.mxu0 0.0
      %466 = vmatpush1.msra.mxu0 %v431
      %467 = vmatprep.subr.mxu0 0.0
      %468 = vmatpush1.msra.mxu0 %v432
      %469 = vmatprep.subr.mxu0 0.0
      %470 = vmatpush1.msra.mxu0 %v433
      %471 = vmatprep.subr.mxu0 0.0
      %472 = vmatpush1.msra.mxu0 %v434
      %473 = vmatprep.subr.mxu0 0.0
      %474 = vmatpush1.msra.mxu0 %v435
      %475 = vmatprep.subr.mxu0 0.0
      %476 = vmatpush1.msra.mxu0 0.0
      %477 = vmatprep.subr.mxu0 0.0
      %478 = vmatpush1.msra.mxu0 0.0
      %479 = vmatprep.subr.mxu0 0.0
      %480 = vmatpush1.msra.mxu0 0.0
      %481 = vmatprep.subr.mxu0 0.0
      %482 = vmatpush1.msra.mxu0 0.0
      %483 = vmatprep.subr.mxu0 0.0
      %484 = vmatpush1.msra.mxu0 0.0
      %485 = vmatprep.subr.mxu0 0.0
      %486 = vmatpush1.msra.mxu0 0.0
      %487 = vmatprep.subr.mxu0 0.0
      %488 = vmatpush1.msra.mxu0 0.0
      %489 = vmatprep.subr.mxu0 0.0
      %490 = vmatpush1.msra.mxu0 0.0
      %491 = vmatprep.subr.mxu0 0.0
      %492 = vmatpush1.msra.mxu0 0.0
      %493 = vmatprep.subr.mxu0 0.0
      %494 = vmatpush1.msra.mxu0 0.0
      %495 = vmatprep.subr.mxu0 0.0
      %496 = vmatpush1.msra.mxu0 0.0
      %497 = vmatprep.subr.mxu0 0.0
      %498 = vmatpush1.msra.mxu0 0.0
      %499 = vmatprep.subr.mxu0 0.0
      %500 = vmatpush1.msra.mxu0 0.0
      %501 = vmatprep.subr.mxu0 0.0
      %502 = vmatpush1.msra.mxu0 0.0
      %503 = vmatprep.subr.mxu0 0.0
      %504 = vmatpush1.msra.mxu0 0.0
      %505 = vmatprep.subr.mxu0 0.0
      %506 = vmatpush1.msra.mxu0 0.0
      %507 = vmatprep.mubr.f32.mxu0 0.0
      %508 = vmatmul.mubr.f32.gmra.mrb[0].mxu0 %v419
      %v509 = vpop.f32.mrb[0].mxu0
      %v510 = vadd.f32 %v441, %v509
      %v511 = vpop.f32.mrb[0].mxu0
      %512 = vdwg.mxu0
      %v513 = vtanh.pop %v510
      %514 = vst [vmem:[#allocation14] sm:$0xff] %v513
    $region69: #{tpu_custom_call.1} parent=1 // pred_fallthru
      _
    // Predicated region
    $region70: #{tpu_custom_call.1} parent=1 // pred_check
      _
    $region71: #{tpu_custom_call.1} parent=1 // pred_check_branch
      %516 = sbr.rel (0) target = $region73
    $region72: #{tpu_custom_call.1} parent=1 // pred_region
      %s518 = ssub.s32 128, 128
      %519 = vsyncadd [#allocation5], %s518
      %s521 = sshll.u32 [#allocation14], 4
      %s522 = int_to_ptr.vmem [resolvable:$true] %s521
      %524 = dma.vmem_to_hbm [thread:$0]  %s522, 128, %s8, [#allocation5]
    $region73: #{tpu_custom_call.1} parent=1 // pred_fallthru
      _
    // Predicated region
    $region74: #{tpu_custom_call.1} parent=1 // pred_check
      _
    $region75: #{tpu_custom_call.1} parent=1 // pred_check_branch
      %526 = sbr.rel (0) target = $region77
    $region76: #{tpu_custom_call.1} parent=1 // pred_region
      %527 = dma.done [#allocation5], 128
    $region77: #{tpu_custom_call.1} parent=1 // pred_fallthru
      _
    %528 = vsyncpa [#allocation4], 1
    %529 = vsyncpa [#allocation7], 1
    %530 = vsyncpa [#allocation10], 1
    %531 = vsyncpa [#allocation13], 1
    %532 = vsyncpa [#allocation5], 1

</llo_original>
